<compile_context>
chip_gen: v5e
topology: v5e:2x2
jax: 0.10.0
libtpu: 0.0.40
codegen_flags: <defaults>
</compile_context>

<pallas_src>
import jax
import jax.numpy as jnp
from jax.experimental import pallas as pl
from jax.experimental.pallas import tpu as pltpu


# ---------------------------------------------------------------------------
# Pallas kernels
# ---------------------------------------------------------------------------
def conv_bn_relu_kernel(p_ref, w_ref, s_ref, o_ref):
    """out = relu(p @ W_folded + shift_folded).

    p_ref: (BM, K)  bf16 im2col patch tile
    w_ref: (K, OC)  bf16 folded conv weight (conv_w * bn_scale)
    s_ref: (1, OC)  f32  folded shift (bn_beta + (conv_b - mean) * bn_scale)
    o_ref: (BM, OC) bf16
    """
    acc = jnp.dot(p_ref[...], w_ref[...], preferred_element_type=jnp.float32)
    o_ref[...] = jnp.maximum(acc + s_ref[...], 0.0).astype(o_ref.dtype)


def conv_head_fused_kernel(p_ref, w3_ref, s3_ref, wh_ref, bh_ref, o_ref):
    """Fused conv3 (+bn+relu) and linear head (valid when conv3 spatial == 1x1).

    p_ref : (BM, K3)   bf16 conv3 im2col patches (one row per image)
    w3_ref: (K3, C3)   bf16 folded conv3 weight
    s3_ref: (1, C3)    f32  folded conv3 shift
    wh_ref: (C3, OUT)  bf16 head weight (pre-transposed, NHWC-ordered)
    bh_ref: (1, OUT)   f32  head bias
    o_ref : (BM, OUT)  f32
    """
    a = jnp.dot(p_ref[...], w3_ref[...], preferred_element_type=jnp.float32)
    a = jnp.maximum(a + s3_ref[...], 0.0)
    out = jnp.dot(a.astype(wh_ref.dtype), wh_ref[...],
                  preferred_element_type=jnp.float32) + bh_ref[...]
    o_ref[...] = out.astype(o_ref.dtype)


def linear_kernel(x_ref, w_ref, b_ref, o_ref):
    """Fallback head: o = x @ W + b (used only when conv3 spatial != 1x1)."""
    acc = jnp.dot(x_ref[...], w_ref[...], preferred_element_type=jnp.float32)
    o_ref[...] = (acc + b_ref[...]).astype(o_ref.dtype)


# ---------------------------------------------------------------------------
# Wrappers (pallas_call sites)
# ---------------------------------------------------------------------------
_MXU_DTYPE = jnp.bfloat16


def _round_up(x, m):
    return ((x + m - 1) // m) * m


def _im2col_nhwc(x, kh, kw, stride):
    """x: (N, H, W, C) -> (N*OH*OW, KH*KW*C), K flattened in (kh, kw, c) order."""
    n, h, w, c = x.shape
    oh = (h - kh) // stride + 1
    ow = (w - kw) // stride + 1
    slabs = [x[:, i:i + stride * oh:stride, j:j + stride * ow:stride, :]
             for i in range(kh) for j in range(kw)]
    p = jnp.concatenate(slabs, axis=-1)                 # (N, OH, OW, KH*KW*C)
    return p.reshape(n * oh * ow, kh * kw * c), oh, ow


def conv_bn_relu(x_nhwc, w_folded, shift, *, stride=2, block_m=512):
    """x_nhwc: (N, H, W, C) bf16; w_folded: (KH*KW*C, OC) bf16; shift: (1, OC) f32.
    Returns (N, OH, OW, OC) bf16."""
    n = x_nhwc.shape[0]
    k, oc = w_folded.shape
    patches, oh, ow = _im2col_nhwc(x_nhwc, 5, 5, stride)
    m = patches.shape[0]
    bm = min(block_m, _round_up(m, 16))
    grid = (pl.cdiv(m, bm),)

    out = pl.pallas_call(
        conv_bn_relu_kernel,
        out_shape=jax.ShapeDtypeStruct((m, oc), x_nhwc.dtype),
        grid_spec=pltpu.PrefetchScalarGridSpec(
            num_scalar_prefetch=0,
            grid=grid,
            in_specs=[
                pl.BlockSpec((bm, k), lambda i: (i, 0)),
                pl.BlockSpec((k, oc), lambda i: (0, 0)),
                pl.BlockSpec((1, oc), lambda i: (0, 0)),
            ],
            out_specs=pl.BlockSpec((bm, oc), lambda i: (i, 0)),
        ),
        compiler_params=pltpu.CompilerParams(
            dimension_semantics=("parallel",)),
    )(patches, w_folded, shift)
    return out.reshape(n, oh, ow, oc)


def conv3_head_fused(x_nhwc, w3_folded, shift3, head_w, head_b, *, stride=2,
                     block_m=512):
    """conv3+bn+relu fused with the linear head; requires conv3 spatial == 1x1."""
    k3, c3 = w3_folded.shape
    out_dim = head_w.shape[1]
    patches, oh, ow = _im2col_nhwc(x_nhwc, 5, 5, stride)
    assert oh == 1 and ow == 1, "fused conv3+head path requires 1x1 conv3 output"
    m = patches.shape[0]                                # == N
    bm = min(block_m, _round_up(m, 16))
    grid = (pl.cdiv(m, bm),)

    return pl.pallas_call(
        conv_head_fused_kernel,
        out_shape=jax.ShapeDtypeStruct((m, out_dim), jnp.float32),
        grid_spec=pltpu.PrefetchScalarGridSpec(
            num_scalar_prefetch=0,
            grid=grid,
            in_specs=[
                pl.BlockSpec((bm, k3), lambda i: (i, 0)),
                pl.BlockSpec((k3, c3), lambda i: (0, 0)),
                pl.BlockSpec((1, c3), lambda i: (0, 0)),
                pl.BlockSpec((c3, out_dim), lambda i: (0, 0)),
                pl.BlockSpec((1, out_dim), lambda i: (0, 0)),
            ],
            out_specs=pl.BlockSpec((bm, out_dim), lambda i: (i, 0)),
        ),
        compiler_params=pltpu.CompilerParams(
            dimension_semantics=("parallel",)),
    )(patches, w3_folded, shift3, head_w, head_b)


def linear(x, w, b, *, block_m=512):
    """x: (N, F); w: (F, OUT) bf16 (pre-transposed); b: (1, OUT) f32."""
    m, f = x.shape
    out_dim = w.shape[1]
    bm = min(block_m, _round_up(m, 16))
    grid = (pl.cdiv(m, bm),)
    return pl.pallas_call(
        linear_kernel,
        out_shape=jax.ShapeDtypeStruct((m, out_dim), jnp.float32),
        grid_spec=pltpu.PrefetchScalarGridSpec(
            num_scalar_prefetch=0,
            grid=grid,
            in_specs=[
                pl.BlockSpec((bm, f), lambda i: (i, 0)),
                pl.BlockSpec((f, out_dim), lambda i: (0, 0)),
                pl.BlockSpec((1, out_dim), lambda i: (0, 0)),
            ],
            out_specs=pl.BlockSpec((bm, out_dim), lambda i: (i, 0)),
        ),
        compiler_params=pltpu.CompilerParams(
            dimension_semantics=("parallel",)),
    )(x, w, b)


# ---------------------------------------------------------------------------
# Parameters: init (PyTorch-shaped), then one-time folding into kernel layout
# ---------------------------------------------------------------------------
def conv2d_size_out(size, kernel_size=5, stride=2):
    return (size - (kernel_size - 1) - 1) // stride + 1


def init_dqn_params(key, h, w, outputs):
    convw = conv2d_size_out(conv2d_size_out(conv2d_size_out(w)))
    convh = conv2d_size_out(conv2d_size_out(conv2d_size_out(h)))
    linear_input_size = convw * convh * 32
    keys = jax.random.split(key, 20)

    def conv_block(ks, in_c, out_c):
        return dict(
            w=0.05 * jax.random.normal(ks[0], (out_c, in_c, 5, 5), jnp.float32),
            b=0.05 * jax.random.normal(ks[1], (out_c,), jnp.float32),
            gamma=jax.random.uniform(ks[2], (out_c,), jnp.float32, 0.5, 1.5),
            beta=0.05 * jax.random.normal(ks[3], (out_c,), jnp.float32),
            mean=0.05 * jax.random.normal(ks[4], (out_c,), jnp.float32),
            var=jax.random.uniform(ks[5], (out_c,), jnp.float32, 0.5, 1.5),
        )

    return {
        "block1": conv_block(keys[0:6], 3, 16),
        "block2": conv_block(keys[6:12], 16, 32),
        "block3": conv_block(keys[12:18], 32, 32),
        "head_w": 0.05 * jax.random.normal(keys[18], (outputs, linear_input_size),
                                           jnp.float32),
        "head_b": 0.05 * jax.random.normal(keys[19], (outputs,), jnp.float32),
    }


def fold_params(params, h, w, eps=1e-5):
    """Fold conv bias + BN (running stats) into the weights, permute to the NHWC
    im2col (kh, kw, c) ordering, pre-transpose the head, and cast MXU operands to bf16."""
    folded = {}
    for name in ("block1", "block2", "block3"):
        p = params[name]
        oc = p["w"].shape[0]
        scale = p["gamma"] / jnp.sqrt(p["var"] + eps)                 # (OC,)
        # (OC, C, KH, KW) -> (KH, KW, C, OC) -> (KH*KW*C, OC), fold scale per OC column
        w_flat = p["w"].transpose(2, 3, 1, 0).reshape(-1, oc)
        folded[name] = dict(
            w=(w_flat * scale[None, :]).astype(_MXU_DTYPE),
            shift=(p["beta"] + (p["b"] - p["mean"]) * scale)
            .reshape(1, oc).astype(jnp.float32),
        )

    convw = conv2d_size_out(conv2d_size_out(conv2d_size_out(w)))
    convh = conv2d_size_out(conv2d_size_out(conv2d_size_out(h)))
    outputs, feat = params["head_w"].shape
    c3 = params["block3"]["w"].shape[0]
    # PyTorch flattens NCHW (c, h, w); our activations flatten NHWC (h, w, c).
    hw = params["head_w"].reshape(outputs, c3, convh, convw)
    hw = hw.transpose(0, 2, 3, 1).reshape(outputs, feat).T            # (F, OUT)
    folded["head_w"] = hw.astype(_MXU_DTYPE)
    folded["head_b"] = params["head_b"].reshape(1, outputs).astype(jnp.float32)
    return folded


# ---------------------------------------------------------------------------
# Forward pass
# ---------------------------------------------------------------------------
def dqn_forward(folded, x_nchw):
    """x: (N, 3, H, W) float32 NCHW -> (N, outputs) float32."""
    # Single layout change + bf16 cast; everything downstream stays NHWC/bf16.
    x = jnp.transpose(x_nchw, (0, 2, 3, 1)).astype(_MXU_DTYPE)
    x = conv_bn_relu(x, folded["block1"]["w"], folded["block1"]["shift"])
    x = conv_bn_relu(x, folded["block2"]["w"], folded["block2"]["shift"])

    n, h2, w2, _ = x.shape
    if conv2d_size_out(h2) == 1 and conv2d_size_out(w2) == 1:
        # conv3 output is 1x1 spatially -> fuse conv3 + head into one kernel.
        return conv3_head_fused(x, folded["block3"]["w"], folded["block3"]["shift"],
                                folded["head_w"], folded["head_b"])

    # General fallback: conv3 then separate head matmul (head_w already NHWC-ordered).
    x = conv_bn_relu(x, folded["block3"]["w"], folded["block3"]["shift"])
    x = x.reshape(n, -1)
    return linear(x, folded["head_w"], folded["head_b"])


if __name__ == "__main__":
    # small shapes: batch=2, 3 channels, 32x32 spatial, 4 actions
    N, H, W, OUTPUTS = 2, 32, 32, 4
    key = jax.random.PRNGKey(0)
    k_param, k_input = jax.random.split(key)

    params = init_dqn_params(k_param, H, W, OUTPUTS)
    folded = fold_params(params, H, W)
    x = jax.random.normal(k_input, (N, 3, H, W), jnp.float32)

    out = jax.jit(dqn_forward)(folded, x)
    out = jax.block_until_ready(out)
    assert out.shape == (N, OUTPUTS), out.shape
    print("KERNEL_OK")
</pallas_src>

<mosaic_0001>
module attributes {stable_mosaic.version = 11 : i64} {
  func.func @conv_bn_relu_kernel(%arg0: i32, %arg1: memref<400x75xbf16, #tpu.memory_space<vmem>>, %arg2: memref<75x16xbf16, #tpu.memory_space<vmem>>, %arg3: memref<1x16xf32, #tpu.memory_space<vmem>>, %arg4: memref<400x16xbf16, #tpu.memory_space<vmem>>) attributes {dimension_semantics = [#tpu.dimension_semantics<parallel>], iteration_bounds = array<i64: 1>, scalar_prefetch = 0 : i64, scratch_operands = 0 : i64, tpu.core_type = #tpu.core_type<tc>, window_params = [{transform_indices = @transform_0, window_bounds = array<i64: 400, 75>}, {pipeline_mode = #tpu.pipeline_mode<synchronous>, transform_indices = @transform_1, window_bounds = array<i64: 75, 16>}, {pipeline_mode = #tpu.pipeline_mode<synchronous>, transform_indices = @transform_2, window_bounds = array<i64: 1, 16>}, {transform_indices = @transform_3, window_bounds = array<i64: 400, 16>}]} {
    %c0 = arith.constant 0 : index
    %c0_0 = arith.constant 0 : index
    %0 = vector.load %arg1[%c0, %c0_0] : memref<400x75xbf16, #tpu.memory_space<vmem>>, vector<400x75xbf16>
    %c0_1 = arith.constant 0 : index
    %c0_2 = arith.constant 0 : index
    %1 = vector.load %arg2[%c0_1, %c0_2] : memref<75x16xbf16, #tpu.memory_space<vmem>>, vector<75x16xbf16>
    %cst = arith.constant dense<0.000000e+00> : vector<400x16xf32>
    %2 = tpu.matmul %0, %1, %cst {dimension_numbers = #tpu.dot_dimension_numbers<[1], [0], [0], [1], [0, 0, 1, 1], [], []>} : vector<400x75xbf16>, vector<75x16xbf16>, vector<400x16xf32> -> vector<400x16xf32>
    %c0_3 = arith.constant 0 : index
    %c0_4 = arith.constant 0 : index
    %3 = vector.load %arg3[%c0_3, %c0_4] : memref<1x16xf32, #tpu.memory_space<vmem>>, vector<1x16xf32>
    %4 = vector.broadcast %3 : vector<1x16xf32> to vector<400x16xf32>
    %5 = arith.addf %2, %4 : vector<400x16xf32>
    %cst_5 = arith.constant 0.000000e+00 : f32
    %6 = vector.broadcast %cst_5 : f32 to vector<400x16xf32>
    %7 = arith.maximumf %5, %6 : vector<400x16xf32>
    %8 = arith.truncf %7 : vector<400x16xf32> to vector<400x16xbf16>
    %c0_6 = arith.constant 0 : index
    %c0_7 = arith.constant 0 : index
    %9 = vector.load %arg4[%c0_6, %c0_7] : memref<400x16xbf16, #tpu.memory_space<vmem>>, vector<400x16xbf16>
    tpu.vector_store %arg4[%c0_6, %c0_7], %8 {strides = array<i32>} : memref<400x16xbf16, #tpu.memory_space<vmem>>, vector<400x16xbf16>,
    return
  }
  func.func @transform_0(%arg0: i32) -> (i32, i32) {
    %c0_i32 = arith.constant 0 : i32
    %c0_i32_0 = arith.constant 0 : i32
    return %arg0, %c0_i32 : i32, i32
  }
  func.func @transform_1(%arg0: i32) -> (i32, i32) {
    %c0_i32 = arith.constant 0 : i32
    %c0_i32_0 = arith.constant 0 : i32
    %c0_i32_1 = arith.constant 0 : i32
    return %c0_i32, %c0_i32_0 : i32, i32
  }
  func.func @transform_2(%arg0: i32) -> (i32, i32) {
    %c0_i32 = arith.constant 0 : i32
    %c0_i32_0 = arith.constant 0 : i32
    %c0_i32_1 = arith.constant 0 : i32
    return %c0_i32, %c0_i32_0 : i32, i32
  }
  func.func @transform_3(%arg0: i32) -> (i32, i32) {
    %c0_i32 = arith.constant 0 : i32
    %c0_i32_0 = arith.constant 0 : i32
    return %arg0, %c0_i32 : i32, i32
  }
}

module attributes {stable_mosaic.version = 11 : i64} {
  func.func @conv_bn_relu_kernel(%arg0: i32, %arg1: memref<64x400xbf16, #tpu.memory_space<vmem>>, %arg2: memref<400x32xbf16, #tpu.memory_space<vmem>>, %arg3: memref<1x32xf32, #tpu.memory_space<vmem>>, %arg4: memref<64x32xbf16, #tpu.memory_space<vmem>>) attributes {dimension_semantics = [#tpu.dimension_semantics<parallel>], iteration_bounds = array<i64: 1>, scalar_prefetch = 0 : i64, scratch_operands = 0 : i64, tpu.core_type = #tpu.core_type<tc>, window_params = [{transform_indices = @transform_0, window_bounds = array<i64: 64, 400>}, {pipeline_mode = #tpu.pipeline_mode<synchronous>, transform_indices = @transform_1, window_bounds = array<i64: 400, 32>}, {pipeline_mode = #tpu.pipeline_mode<synchronous>, transform_indices = @transform_2, window_bounds = array<i64: 1, 32>}, {transform_indices = @transform_3, window_bounds = array<i64: 64, 32>}]} {
    %c0 = arith.constant 0 : index
    %c0_0 = arith.constant 0 : index
    %0 = vector.load %arg1[%c0, %c0_0] : memref<64x400xbf16, #tpu.memory_space<vmem>>, vector<64x400xbf16>
    %c0_1 = arith.constant 0 : index
    %c0_2 = arith.constant 0 : index
    %1 = vector.load %arg2[%c0_1, %c0_2] : memref<400x32xbf16, #tpu.memory_space<vmem>>, vector<400x32xbf16>
    %cst = arith.constant dense<0.000000e+00> : vector<64x32xf32>
    %2 = tpu.matmul %0, %1, %cst {dimension_numbers = #tpu.dot_dimension_numbers<[1], [0], [0], [1], [0, 0, 1, 1], [], []>} : vector<64x400xbf16>, vector<400x32xbf16>, vector<64x32xf32> -> vector<64x32xf32>
    %c0_3 = arith.constant 0 : index
    %c0_4 = arith.constant 0 : index
    %3 = vector.load %arg3[%c0_3, %c0_4] : memref<1x32xf32, #tpu.memory_space<vmem>>, vector<1x32xf32>
    %4 = vector.broadcast %3 : vector<1x32xf32> to vector<64x32xf32>
    %5 = arith.addf %2, %4 : vector<64x32xf32>
    %cst_5 = arith.constant 0.000000e+00 : f32
    %6 = vector.broadcast %cst_5 : f32 to vector<64x32xf32>
    %7 = arith.maximumf %5, %6 : vector<64x32xf32>
    %8 = arith.truncf %7 : vector<64x32xf32> to vector<64x32xbf16>
    %c0_6 = arith.constant 0 : index
    %c0_7 = arith.constant 0 : index
    %9 = vector.load %arg4[%c0_6, %c0_7] : memref<64x32xbf16, #tpu.memory_space<vmem>>, vector<64x32xbf16>
    tpu.vector_store %arg4[%c0_6, %c0_7], %8 {strides = array<i32>} : memref<64x32xbf16, #tpu.memory_space<vmem>>, vector<64x32xbf16>,
    return
  }
  func.func @transform_0(%arg0: i32) -> (i32, i32) {
    %c0_i32 = arith.constant 0 : i32
    %c0_i32_0 = arith.constant 0 : i32
    return %arg0, %c0_i32 : i32, i32
  }
  func.func @transform_1(%arg0: i32) -> (i32, i32) {
    %c0_i32 = arith.constant 0 : i32
    %c0_i32_0 = arith.constant 0 : i32
    %c0_i32_1 = arith.constant 0 : i32
    return %c0_i32, %c0_i32_0 : i32, i32
  }
  func.func @transform_2(%arg0: i32) -> (i32, i32) {
    %c0_i32 = arith.constant 0 : i32
    %c0_i32_0 = arith.constant 0 : i32
    %c0_i32_1 = arith.constant 0 : i32
    return %c0_i32, %c0_i32_0 : i32, i32
  }
  func.func @transform_3(%arg0: i32) -> (i32, i32) {
    %c0_i32 = arith.constant 0 : i32
    %c0_i32_0 = arith.constant 0 : i32
    return %arg0, %c0_i32 : i32, i32
  }
}

module attributes {stable_mosaic.version = 11 : i64} {
  func.func @conv_head_fused_kernel(%arg0: i32, %arg1: memref<16x800xbf16, #tpu.memory_space<vmem>>, %arg2: memref<800x32xbf16, #tpu.memory_space<vmem>>, %arg3: memref<1x32xf32, #tpu.memory_space<vmem>>, %arg4: memref<32x4xbf16, #tpu.memory_space<vmem>>, %arg5: memref<1x4xf32, #tpu.memory_space<vmem>>, %arg6: memref<16x4xf32, #tpu.memory_space<vmem>>) attributes {dimension_semantics = [#tpu.dimension_semantics<parallel>], iteration_bounds = array<i64: 1>, scalar_prefetch = 0 : i64, scratch_operands = 0 : i64, tpu.core_type = #tpu.core_type<tc>, window_params = [{transform_indices = @transform_0, window_bounds = array<i64: 16, 800>}, {pipeline_mode = #tpu.pipeline_mode<synchronous>, transform_indices = @transform_1, window_bounds = array<i64: 800, 32>}, {pipeline_mode = #tpu.pipeline_mode<synchronous>, transform_indices = @transform_2, window_bounds = array<i64: 1, 32>}, {pipeline_mode = #tpu.pipeline_mode<synchronous>, transform_indices = @transform_3, window_bounds = array<i64: 32, 4>}, {pipeline_mode = #tpu.pipeline_mode<synchronous>, transform_indices = @transform_4, window_bounds = array<i64: 1, 4>}, {transform_indices = @transform_5, window_bounds = array<i64: 16, 4>}]} {
    %c0 = arith.constant 0 : index
    %c0_0 = arith.constant 0 : index
    %0 = vector.load %arg1[%c0, %c0_0] : memref<16x800xbf16, #tpu.memory_space<vmem>>, vector<16x800xbf16>
    %c0_1 = arith.constant 0 : index
    %c0_2 = arith.constant 0 : index
    %1 = vector.load %arg2[%c0_1, %c0_2] : memref<800x32xbf16, #tpu.memory_space<vmem>>, vector<800x32xbf16>
    %cst = arith.constant dense<0.000000e+00> : vector<16x32xf32>
    %2 = tpu.matmul %0, %1, %cst {dimension_numbers = #tpu.dot_dimension_numbers<[1], [0], [0], [1], [0, 0, 1, 1], [], []>} : vector<16x800xbf16>, vector<800x32xbf16>, vector<16x32xf32> -> vector<16x32xf32>
    %c0_3 = arith.constant 0 : index
    %c0_4 = arith.constant 0 : index
    %3 = vector.load %arg3[%c0_3, %c0_4] : memref<1x32xf32, #tpu.memory_space<vmem>>, vector<1x32xf32>
    %4 = vector.broadcast %3 : vector<1x32xf32> to vector<16x32xf32>
    %5 = arith.addf %2, %4 : vector<16x32xf32>
    %cst_5 = arith.constant 0.000000e+00 : f32
    %6 = vector.broadcast %cst_5 : f32 to vector<16x32xf32>
    %7 = arith.maximumf %5, %6 : vector<16x32xf32>
    %8 = arith.truncf %7 : vector<16x32xf32> to vector<16x32xbf16>
    %c0_6 = arith.constant 0 : index
    %c0_7 = arith.constant 0 : index
    %9 = vector.load %arg4[%c0_6, %c0_7] : memref<32x4xbf16, #tpu.memory_space<vmem>>, vector<32x4xbf16>
    %cst_8 = arith.constant dense<0.000000e+00> : vector<16x4xf32>
    %10 = tpu.matmul %8, %9, %cst_8 {dimension_numbers = #tpu.dot_dimension_numbers<[1], [0], [0], [1], [0, 0, 1, 1], [], []>} : vector<16x32xbf16>, vector<32x4xbf16>, vector<16x4xf32> -> vector<16x4xf32>
    %c0_9 = arith.constant 0 : index
    %c0_10 = arith.constant 0 : index
    %11 = vector.load %arg5[%c0_9, %c0_10] : memref<1x4xf32, #tpu.memory_space<vmem>>, vector<1x4xf32>
    %12 = vector.broadcast %11 : vector<1x4xf32> to vector<16x4xf32>
    %13 = arith.addf %10, %12 : vector<16x4xf32>
    %c0_11 = arith.constant 0 : index
    %c0_12 = arith.constant 0 : index
    %14 = vector.load %arg6[%c0_11, %c0_12] : memref<16x4xf32, #tpu.memory_space<vmem>>, vector<16x4xf32>
    tpu.vector_store %arg6[%c0_11, %c0_12], %13 {strides = array<i32>} : memref<16x4xf32, #tpu.memory_space<vmem>>, vector<16x4xf32>,
    return
  }
  func.func @transform_0(%arg0: i32) -> (i32, i32) {
    %c0_i32 = arith.constant 0 : i32
    %c0_i32_0 = arith.constant 0 : i32
    return %arg0, %c0_i32 : i32, i32
  }
  func.func @transform_1(%arg0: i32) -> (i32, i32) {
    %c0_i32 = arith.constant 0 : i32
    %c0_i32_0 = arith.constant 0 : i32
    %c0_i32_1 = arith.constant 0 : i32
    return %c0_i32, %c0_i32_0 : i32, i32
  }
  func.func @transform_2(%arg0: i32) -> (i32, i32) {
    %c0_i32 = arith.constant 0 : i32
    %c0_i32_0 = arith.constant 0 : i32
    %c0_i32_1 = arith.constant 0 : i32
    return %c0_i32, %c0_i32_0 : i32, i32
  }
  func.func @transform_3(%arg0: i32) -> (i32, i32) {
    %c0_i32 = arith.constant 0 : i32
    %c0_i32_0 = arith.constant 0 : i32
    %c0_i32_1 = arith.constant 0 : i32
    return %c0_i32, %c0_i32_0 : i32, i32
  }
  func.func @transform_4(%arg0: i32) -> (i32, i32) {
    %c0_i32 = arith.constant 0 : i32
    %c0_i32_0 = arith.constant 0 : i32
    %c0_i32_1 = arith.constant 0 : i32
    return %c0_i32, %c0_i32_0 : i32, i32
  }
  func.func @transform_5(%arg0: i32) -> (i32, i32) {
    %c0_i32 = arith.constant 0 : i32
    %c0_i32_0 = arith.constant 0 : i32
    return %arg0, %c0_i32 : i32, i32
  }
}

</mosaic_0001>

<llo_original>
// kernel: dqn_forward.3
$region0: #{dqn_forward.3}
  #allocation0 [shape = 'u32[]', space=smem, size = 0x4, offset = 0x4, fixed_abs, tag = 'smem constant byte address 0x4 - core index']
  #allocation1 [shape = 'u32[72,128]{1,0:T(1,128)}', space=vmem, size = 0x9000, scoped, tag = 'internal scratch']
  %s0 = inlined_call_operand.vmem [shape: bf16[392,75], index: 0, kind: input, shape index: {}]
  %s1 = inlined_call_operand.vmem [shape: bf16[75,16], index: 1, kind: input, shape index: {}]
  %s2 = inlined_call_operand.vmem [shape: f32[1,16], index: 2, kind: input, shape index: {}]
  %s3 = inlined_call_operand.vmem [shape: bf16[392,16], index: 3, kind: output, shape index: {}]
  %s4 = sld [smem:[#allocation0]]
  $region59: #{dqn_forward.3} parent=0
    _
  %s6 = ssub.s32 1, %s4
  %s7 = scalar_select 0, %s6, %s4
  $region1: #{dqn_forward.3} parent=0
    #allocation2 [shape = 'u8[102400]{0}', space=vmem, size = 0x19000, scoped, tag = 'output window, operand 0, single buffered']
    // Predicated region
    $region2: #{dqn_forward.3} parent=1 // pred_check
      _
    $region3: #{dqn_forward.3} parent=1 // pred_check_branch
      %9 = sbr.rel (0) target = $region5
    $region4: #{dqn_forward.3} parent=1 // pred_region
      _
    $region5: #{dqn_forward.3} parent=1 // pred_fallthru
      _
    // Predicated region
    $region6: #{dqn_forward.3} parent=1 // pred_check
      _
    $region7: #{dqn_forward.3} parent=1 // pred_check_branch
      %11 = sbr.rel (0) target = $region9
    $region8: #{dqn_forward.3} parent=1 // pred_region
      _
    $region9: #{dqn_forward.3} parent=1 // pred_fallthru
      _
    // Predicated region
    $region10: #{dqn_forward.3} parent=1 // pred_check
      _
    $region11: #{dqn_forward.3} parent=1 // pred_check_branch
      %13 = sbr.rel (0) target = $region13
    $region12: #{dqn_forward.3} parent=1 // pred_region
      _
    $region13: #{dqn_forward.3} parent=1 // pred_fallthru
      _
    %v15 = vld [vmem:[%s0] sm:$0xf]
    %v16 = vld [vmem:[%s0 + $0x4] sm:$0xf]
    %v17 = vld [vmem:[%s0 + $0x8] sm:$0xf]
    %v18 = vld [vmem:[%s0 + $0xc] sm:$0xf]
    %v19 = vld [vmem:[%s0 + $0x10] sm:$0xf]
    %v20 = vld [vmem:[%s0 + $0x14] sm:$0xf]
    %v21 = vld [vmem:[%s0 + $0x18] sm:$0xf]
    %v22 = vld [vmem:[%s0 + $0x1c] sm:$0xf]
    %v23 = vld [vmem:[%s0 + $0x20] sm:$0xf]
    %v24 = vld [vmem:[%s0 + $0x24] sm:$0xf]
    %v25 = vld [vmem:[%s0 + $0x28] sm:$0xf]
    %v26 = vld [vmem:[%s0 + $0x2c] sm:$0xf]
    %v27 = vld [vmem:[%s0 + $0x30] sm:$0xf]
    %v28 = vld [vmem:[%s0 + $0x34] sm:$0xf]
    %v29 = vld [vmem:[%s0 + $0x38] sm:$0xf]
    %v30 = vld [vmem:[%s0 + $0x3c] sm:$0xf]
    %v31 = vld [vmem:[%s0 + $0x40] sm:$0xf]
    %v32 = vld [vmem:[%s0 + $0x44] sm:$0xf]
    %v33 = vld [vmem:[%s0 + $0x48] sm:$0xf]
    %v34 = vld [vmem:[%s0 + $0x4c] sm:$0xf]
    %v35 = vld [vmem:[%s0 + $0x50] sm:$0xf]
    %v36 = vld [vmem:[%s0 + $0x54] sm:$0xf]
    %v37 = vld [vmem:[%s0 + $0x58] sm:$0xf]
    %v38 = vld [vmem:[%s0 + $0x5c] sm:$0xf]
    %v39 = vld [vmem:[%s0 + $0x60] sm:$0xf]
    %v40 = vld [vmem:[%s0 + $0x64] sm:$0xf]
    %v41 = vld [vmem:[%s0 + $0x68] sm:$0xf]
    %v42 = vld [vmem:[%s0 + $0x6c] sm:$0xf]
    %v43 = vld [vmem:[%s0 + $0x70] sm:$0xf]
    %v44 = vld [vmem:[%s0 + $0x74] sm:$0xf]
    %v45 = vld [vmem:[%s0 + $0x78] sm:$0xf]
    %v46 = vld [vmem:[%s0 + $0x7c] sm:$0xf]
    %v47 = vld [vmem:[%s0 + $0x80] sm:$0xf]
    %v48 = vld [vmem:[%s0 + $0x84] sm:$0xf]
    %v49 = vld [vmem:[%s0 + $0x88] sm:$0xf]
    %v50 = vld [vmem:[%s0 + $0x8c] sm:$0xf]
    %v51 = vld [vmem:[%s0 + $0x90] sm:$0xf]
    %v52 = vld [vmem:[%s0 + $0x94] sm:$0xf]
    %v53 = vld [vmem:[%s0 + $0x98] sm:$0xf]
    %v54 = vld [vmem:[%s0 + $0x9c] sm:$0xf]
    %v55 = vld [vmem:[%s0 + $0xa0] sm:$0xf]
    %v56 = vld [vmem:[%s0 + $0xa4] sm:$0xf]
    %v57 = vld [vmem:[%s0 + $0xa8] sm:$0xf]
    %v58 = vld [vmem:[%s0 + $0xac] sm:$0xf]
    %v59 = vld [vmem:[%s0 + $0xb0] sm:$0xf]
    %v60 = vld [vmem:[%s0 + $0xb4] sm:$0xf]
    %v61 = vld [vmem:[%s0 + $0xb8] sm:$0xf]
    %v62 = vld [vmem:[%s0 + $0xbc] sm:$0xf]
    %v63 = vld [vmem:[%s0 + $0xc0] sm:$0xf]
    %v64 = vld [vmem:[%s0 + $0xc4] sm:$0xf]
    %v65 = vld [vmem:[%s1] sm:$0xf]
    %v66 = vld [vmem:[%s1 + $0x4] sm:$0xf]
    %v67 = vld [vmem:[%s1 + $0x8] sm:$0xf]
    %v68 = vld [vmem:[%s1 + $0xc] sm:$0xf]
    %v69 = vld [vmem:[%s1 + $0x10] sm:$0xf]
    %v70 = vld [vmem:[%s1 + $0x14] sm:$0xf]
    %v71 = vld [vmem:[%s1 + $0x18] sm:$0xf]
    %v72 = vld [vmem:[%s1 + $0x1c] sm:$0xf]
    %v73 = vld [vmem:[%s1 + $0x20] sm:$0xf]
    %v74 = vld [vmem:[%s1 + $0x24] sm:$0x3]
    %v75 = vld [vmem:[%s2] sm:$0x1]
    %v77 = vperm.slane %v75, 0
    %v129 = vunpack.c.l.b16 %v15
    %v130 = vunpack.c.l.b16 %v16
    %v131 = vunpack.c.l.b16 %v17
    %v132 = vunpack.c.l.b16 %v18
    %v133 = vunpack.c.l.b16 %v19
    %v134 = vunpack.c.l.b16 %v20
    %v135 = vunpack.c.l.b16 %v21
    %v136 = vunpack.c.l.b16 %v22
    %v137 = vunpack.c.l.b16 %v23
    %v138 = vunpack.c.l.b16 %v24
    %v139 = vunpack.c.l.b16 %v25
    %v140 = vunpack.c.l.b16 %v26
    %v141 = vunpack.c.l.b16 %v27
    %v142 = vunpack.c.l.b16 %v28
    %v143 = vunpack.c.l.b16 %v29
    %v144 = vunpack.c.l.b16 %v30
    %v145 = vunpack.c.l.b16 %v31
    %v146 = vunpack.c.l.b16 %v32
    %v147 = vunpack.c.l.b16 %v33
    %v148 = vunpack.c.l.b16 %v34
    %v149 = vunpack.c.l.b16 %v35
    %v150 = vunpack.c.l.b16 %v36
    %v151 = vunpack.c.l.b16 %v37
    %v152 = vunpack.c.l.b16 %v38
    %v153 = vunpack.c.l.b16 %v39
    %v154 = vunpack.c.l.b16 %v40
    %v155 = vunpack.c.l.b16 %v41
    %v156 = vunpack.c.l.b16 %v42
    %v157 = vunpack.c.l.b16 %v43
    %v158 = vunpack.c.l.b16 %v44
    %v159 = vunpack.c.l.b16 %v45
    %v160 = vunpack.c.l.b16 %v46
    %v161 = vunpack.c.l.b16 %v47
    %v162 = vunpack.c.l.b16 %v48
    %v163 = vunpack.c.l.b16 %v49
    %v164 = vunpack.c.l.b16 %v50
    %v165 = vunpack.c.l.b16 %v51
    %v166 = vunpack.c.l.b16 %v52
    %v167 = vunpack.c.l.b16 %v53
    %v168 = vunpack.c.l.b16 %v54
    %v169 = vunpack.c.l.b16 %v55
    %v170 = vunpack.c.l.b16 %v56
    %v171 = vunpack.c.l.b16 %v57
    %v172 = vunpack.c.l.b16 %v58
    %v173 = vunpack.c.l.b16 %v59
    %v174 = vunpack.c.l.b16 %v60
    %v175 = vunpack.c.l.b16 %v61
    %v176 = vunpack.c.l.b16 %v62
    %v177 = vunpack.c.l.b16 %v63
    %v178 = vunpack.c.l.b16 %v64
    %v179 = vpack.c.b16 %v130, %v129
    %v180 = vpack.c.b16 %v132, %v131
    %v181 = vpack.c.b16 %v134, %v133
    %v182 = vpack.c.b16 %v136, %v135
    %v183 = vpack.c.b16 %v138, %v137
    %v184 = vpack.c.b16 %v140, %v139
    %v185 = vpack.c.b16 %v142, %v141
    %v186 = vpack.c.b16 %v144, %v143
    %v187 = vpack.c.b16 %v146, %v145
    %v188 = vpack.c.b16 %v148, %v147
    %v189 = vpack.c.b16 %v150, %v149
    %v190 = vpack.c.b16 %v152, %v151
    %v191 = vpack.c.b16 %v154, %v153
    %v192 = vpack.c.b16 %v156, %v155
    %v193 = vpack.c.b16 %v158, %v157
    %v194 = vpack.c.b16 %v160, %v159
    %v195 = vpack.c.b16 %v162, %v161
    %v196 = vpack.c.b16 %v164, %v163
    %v197 = vpack.c.b16 %v166, %v165
    %v198 = vpack.c.b16 %v168, %v167
    %v199 = vpack.c.b16 %v170, %v169
    %v200 = vpack.c.b16 %v172, %v171
    %v201 = vpack.c.b16 %v174, %v173
    %v202 = vpack.c.b16 %v176, %v175
    %v203 = vpack.c.b16 %v178, %v177
    %v214 = vunpack.c.l.b16 %v65
    %v215 = vunpack.c.l.b16 %v66
    %v216 = vunpack.c.l.b16 %v67
    %v217 = vunpack.c.l.b16 %v68
    %v218 = vunpack.c.l.b16 %v69
    %v219 = vunpack.c.l.b16 %v70
    %v220 = vunpack.c.l.b16 %v71
    %v221 = vunpack.c.l.b16 %v72
    %v222 = vunpack.c.l.b16 %v73
    %v223 = vunpack.c.l.b16 %v74
    %v224 = vpack.c.b16 %v215, %v214
    %v225 = vpack.c.b16 %v217, %v216
    %v226 = vpack.c.b16 %v219, %v218
    %v227 = vpack.c.b16 %v221, %v220
    %v228 = vpack.c.b16 %v223, %v222
    %vm233 = vcmask 613376
    %v235 = vsel %vm233, %v179, 0
    %v238 = vsel %vm233, %v180, 0
    %v241 = vsel %vm233, %v181, 0
    %v244 = vsel %vm233, %v182, 0
    %v247 = vsel %vm233, %v183, 0
    %v250 = vsel %vm233, %v184, 0
    %v253 = vsel %vm233, %v185, 0
    %v256 = vsel %vm233, %v186, 0
    %v259 = vsel %vm233, %v187, 0
    %v262 = vsel %vm233, %v188, 0
    %v265 = vsel %vm233, %v189, 0
    %v268 = vsel %vm233, %v190, 0
    %v271 = vsel %vm233, %v191, 0
    %v274 = vsel %vm233, %v192, 0
    %v277 = vsel %vm233, %v193, 0
    %v280 = vsel %vm233, %v194, 0
    %v283 = vsel %vm233, %v195, 0
    %v286 = vsel %vm233, %v196, 0
    %v289 = vsel %vm233, %v197, 0
    %v292 = vsel %vm233, %v198, 0
    %v295 = vsel %vm233, %v199, 0
    %v298 = vsel %vm233, %v200, 0
    %v301 = vsel %vm233, %v201, 0
    %v304 = vsel %vm233, %v202, 0
    %v307 = vsel %vm233, %v203, 0
    %vm309 = vcmask 1044480
    %vm310 = vcmask 1045504
    %v311 = vsel %vm309, 4294967295, 65535
    %v312 = vsel %vm310, %v311, 0
    %v314 = vand.u32 %v228, %v312
    %316 = vmatpush.bf16.msra.mxu0 0
    %317 = vmatpush.bf16.msra.mxu0 0
    %318 = vmatpush.bf16.msra.mxu0 0
    %319 = vmatpush.bf16.msra.mxu0 %v314
    %320 = vmatpush.bf16.msra.mxu0 %v227
    %321 = vmatpush.bf16.msra.mxu0 %v226
    %322 = vmatpush.bf16.msra.mxu0 %v225
    %323 = vmatpush.bf16.msra.mxu0 %v224
    %324 = vmatmul.bf16.gmra.mxu0 %v235
    %v325 = vpop.f32.mrf.mxu0
    %v326 = vadd.f32 %v77, %v325
    %v327 = vpop.f32.mrf.mxu0
    %v328 = vadd.f32 %v77, %v327
    %329 = vmatmul.bf16.gmra.mxu0 %v238
    %v330 = vpop.f32.mrf.mxu0
    %v331 = vadd.f32 %v77, %v330
    %v332 = vpop.f32.mrf.mxu0
    %v333 = vadd.f32 %v77, %v332
    %334 = vmatmul.bf16.gmra.mxu0 %v241
    %v335 = vpop.f32.mrf.mxu0
    %v336 = vadd.f32 %v77, %v335
    %v337 = vpop.f32.mrf.mxu0
    %v338 = vadd.f32 %v77, %v337
    %339 = vmatmul.bf16.gmra.mxu0 %v244
    %v340 = vpop.f32.mrf.mxu0
    %v341 = vadd.f32 %v77, %v340
    %v342 = vpop.f32.mrf.mxu0
    %v343 = vadd.f32 %v77, %v342
    %344 = vmatmul.bf16.gmra.mxu0 %v247
    %v345 = vpop.f32.mrf.mxu0
    %v346 = vadd.f32 %v77, %v345
    %v347 = vpop.f32.mrf.mxu0
    %v348 = vadd.f32 %v77, %v347
    %349 = vmatmul.bf16.gmra.mxu0 %v250
    %v350 = vpop.f32.mrf.mxu0
    %v351 = vadd.f32 %v77, %v350
    %v352 = vpop.f32.mrf.mxu0
    %v353 = vadd.f32 %v77, %v352
    %354 = vmatmul.bf16.gmra.mxu0 %v253
    %v355 = vpop.f32.mrf.mxu0
    %v356 = vadd.f32 %v77, %v355
    %v357 = vpop.f32.mrf.mxu0
    %v358 = vadd.f32 %v77, %v357
    %359 = vmatmul.bf16.gmra.mxu0 %v256
    %v360 = vpop.f32.mrf.mxu0
    %v361 = vadd.f32 %v77, %v360
    %v362 = vpop.f32.mrf.mxu0
    %v363 = vadd.f32 %v77, %v362
    %364 = vmatmul.bf16.gmra.mxu0 %v259
    %v365 = vpop.f32.mrf.mxu0
    %v366 = vadd.f32 %v77, %v365
    %v367 = vpop.f32.mrf.mxu0
    %v368 = vadd.f32 %v77, %v367
    %369 = vmatmul.bf16.gmra.mxu0 %v262
    %v370 = vpop.f32.mrf.mxu0
    %v371 = vadd.f32 %v77, %v370
    %v372 = vpop.f32.mrf.mxu0
    %v373 = vadd.f32 %v77, %v372
    %374 = vmatmul.bf16.gmra.mxu0 %v265
    %v375 = vpop.f32.mrf.mxu0
    %v376 = vadd.f32 %v77, %v375
    %v377 = vpop.f32.mrf.mxu0
    %v378 = vadd.f32 %v77, %v377
    %379 = vmatmul.bf16.gmra.mxu0 %v268
    %v380 = vpop.f32.mrf.mxu0
    %v381 = vadd.f32 %v77, %v380
    %v382 = vpop.f32.mrf.mxu0
    %v383 = vadd.f32 %v77, %v382
    %384 = vmatmul.bf16.gmra.mxu0 %v271
    %v385 = vpop.f32.mrf.mxu0
    %v386 = vadd.f32 %v77, %v385
    %v387 = vpop.f32.mrf.mxu0
    %v388 = vadd.f32 %v77, %v387
    %389 = vmatmul.bf16.gmra.mxu0 %v274
    %v390 = vpop.f32.mrf.mxu0
    %v391 = vadd.f32 %v77, %v390
    %v392 = vpop.f32.mrf.mxu0
    %v393 = vadd.f32 %v77, %v392
    %394 = vmatmul.bf16.gmra.mxu0 %v277
    %v395 = vpop.f32.mrf.mxu0
    %v396 = vadd.f32 %v77, %v395
    %v397 = vpop.f32.mrf.mxu0
    %v398 = vadd.f32 %v77, %v397
    %399 = vmatmul.bf16.gmra.mxu0 %v280
    %v400 = vpop.f32.mrf.mxu0
    %v401 = vadd.f32 %v77, %v400
    %v402 = vpop.f32.mrf.mxu0
    %v403 = vadd.f32 %v77, %v402
    %404 = vmatmul.bf16.gmra.mxu0 %v283
    %v405 = vpop.f32.mrf.mxu0
    %v406 = vadd.f32 %v77, %v405
    %v407 = vpop.f32.mrf.mxu0
    %v408 = vadd.f32 %v77, %v407
    %409 = vmatmul.bf16.gmra.mxu0 %v286
    %v410 = vpop.f32.mrf.mxu0
    %v411 = vadd.f32 %v77, %v410
    %v412 = vpop.f32.mrf.mxu0
    %v413 = vadd.f32 %v77, %v412
    %414 = vmatmul.bf16.gmra.mxu0 %v289
    %v415 = vpop.f32.mrf.mxu0
    %v416 = vadd.f32 %v77, %v415
    %v417 = vpop.f32.mrf.mxu0
    %v418 = vadd.f32 %v77, %v417
    %419 = vmatmul.bf16.gmra.mxu0 %v292
    %v420 = vpop.f32.mrf.mxu0
    %v421 = vadd.f32 %v77, %v420
    %v422 = vpop.f32.mrf.mxu0
    %v423 = vadd.f32 %v77, %v422
    %424 = vmatmul.bf16.gmra.mxu0 %v295
    %v425 = vpop.f32.mrf.mxu0
    %v426 = vadd.f32 %v77, %v425
    %v427 = vpop.f32.mrf.mxu0
    %v428 = vadd.f32 %v77, %v427
    %429 = vmatmul.bf16.gmra.mxu0 %v298
    %v430 = vpop.f32.mrf.mxu0
    %v431 = vadd.f32 %v77, %v430
    %v432 = vpop.f32.mrf.mxu0
    %v433 = vadd.f32 %v77, %v432
    %434 = vmatmul.bf16.gmra.mxu0 %v301
    %v435 = vpop.f32.mrf.mxu0
    %v436 = vadd.f32 %v77, %v435
    %v437 = vpop.f32.mrf.mxu0
    %v438 = vadd.f32 %v77, %v437
    %439 = vmatmul.bf16.gmra.mxu0 %v304
    %v440 = vpop.f32.mrf.mxu0
    %v441 = vadd.f32 %v77, %v440
    %v442 = vpop.f32.mrf.mxu0
    %v443 = vadd.f32 %v77, %v442
    %444 = vmatmul.bf16.gmra.mxu0 %v307
    %v445 = vpop.f32.mrf.mxu0
    %v446 = vadd.f32 %v77, %v445
    %v447 = vpop.f32.mrf.mxu0
    %v448 = vadd.f32 %v77, %v447
    %449 = vdwg.mxu0
    %v450 = vmax.f32 %v326, 0.0
    %v451 = vmax.f32 %v328, 0.0
    %v452 = vmax.f32 %v331, 0.0
    %v453 = vmax.f32 %v333, 0.0
    %v454 = vmax.f32 %v336, 0.0
    %v455 = vmax.f32 %v338, 0.0
    %v456 = vmax.f32 %v341, 0.0
    %v457 = vmax.f32 %v343, 0.0
    %v458 = vmax.f32 %v346, 0.0
    %v459 = vmax.f32 %v348, 0.0
    %v460 = vmax.f32 %v351, 0.0
    %v461 = vmax.f32 %v353, 0.0
    %v462 = vmax.f32 %v356, 0.0
    %v463 = vmax.f32 %v358, 0.0
    %v464 = vmax.f32 %v361, 0.0
    %v465 = vmax.f32 %v363, 0.0
    %v466 = vmax.f32 %v366, 0.0
    %v467 = vmax.f32 %v368, 0.0
    %v468 = vmax.f32 %v371, 0.0
    %v469 = vmax.f32 %v373, 0.0
    %v470 = vmax.f32 %v376, 0.0
    %v471 = vmax.f32 %v378, 0.0
    %v472 = vmax.f32 %v381, 0.0
    %v473 = vmax.f32 %v383, 0.0
    %v474 = vmax.f32 %v386, 0.0
    %v475 = vmax.f32 %v388, 0.0
    %v476 = vmax.f32 %v391, 0.0
    %v477 = vmax.f32 %v393, 0.0
    %v478 = vmax.f32 %v396, 0.0
    %v479 = vmax.f32 %v398, 0.0
    %v480 = vmax.f32 %v401, 0.0
    %v481 = vmax.f32 %v403, 0.0
    %v482 = vmax.f32 %v406, 0.0
    %v483 = vmax.f32 %v408, 0.0
    %v484 = vmax.f32 %v411, 0.0
    %v485 = vmax.f32 %v413, 0.0
    %v486 = vmax.f32 %v416, 0.0
    %v487 = vmax.f32 %v418, 0.0
    %v488 = vmax.f32 %v421, 0.0
    %v489 = vmax.f32 %v423, 0.0
    %v490 = vmax.f32 %v426, 0.0
    %v491 = vmax.f32 %v428, 0.0
    %v492 = vmax.f32 %v431, 0.0
    %v493 = vmax.f32 %v433, 0.0
    %v494 = vmax.f32 %v436, 0.0
    %v495 = vmax.f32 %v438, 0.0
    %v496 = vmax.f32 %v441, 0.0
    %v497 = vmax.f32 %v443, 0.0
    %v498 = vmax.f32 %v446, 0.0
    %v499 = vmax.f32 %v448, 0.0
    %v500 = vpack.c.bf16 %v450, %v450
    %v501 = vpack.c.bf16 %v451, %v451
    %v502 = vpack.c.bf16 %v452, %v452
    %v503 = vpack.c.bf16 %v453, %v453
    %v504 = vpack.c.bf16 %v454, %v454
    %v505 = vpack.c.bf16 %v455, %v455
    %v506 = vpack.c.bf16 %v456, %v456
    %v507 = vpack.c.bf16 %v457, %v457
    %v508 = vpack.c.bf16 %v458, %v458
    %v509 = vpack.c.bf16 %v459, %v459
    %v510 = vpack.c.bf16 %v460, %v460
    %v511 = vpack.c.bf16 %v461, %v461
    %v512 = vpack.c.bf16 %v462, %v462
    %v513 = vpack.c.bf16 %v463, %v463
    %v514 = vpack.c.bf16 %v464, %v464
    %v515 = vpack.c.bf16 %v465, %v465
    %v516 = vpack.c.bf16 %v466, %v466
    %v517 = vpack.c.bf16 %v467, %v467
    %v518 = vpack.c.bf16 %v468, %v468
    %v519 = vpack.c.bf16 %v469, %v469
    %v520 = vpack.c.bf16 %v470, %v470
    %v521 = vpack.c.bf16 %v471, %v471
    %v522 = vpack.c.bf16 %v472, %v472
    %v523 = vpack.c.bf16 %v473, %v473
    %v524 = vpack.c.bf16 %v474, %v474
    %v525 = vpack.c.bf16 %v475, %v475
    %v526 = vpack.c.bf16 %v476, %v476
    %v527 = vpack.c.bf16 %v477, %v477
    %v528 = vpack.c.bf16 %v478, %v478
    %v529 = vpack.c.bf16 %v479, %v479
    %v530 = vpack.c.bf16 %v480, %v480
    %v531 = vpack.c.bf16 %v481, %v481
    %v532 = vpack.c.bf16 %v482, %v482
    %v533 = vpack.c.bf16 %v483, %v483
    %v534 = vpack.c.bf16 %v484, %v484
    %v535 = vpack.c.bf16 %v485, %v485
    %v536 = vpack.c.bf16 %v486, %v486
    %v537 = vpack.c.bf16 %v487, %v487
    %v538 = vpack.c.bf16 %v488, %v488
    %v539 = vpack.c.bf16 %v489, %v489
    %v540 = vpack.c.bf16 %v490, %v490
    %v541 = vpack.c.bf16 %v491, %v491
    %v542 = vpack.c.bf16 %v492, %v492
    %v543 = vpack.c.bf16 %v493, %v493
    %v544 = vpack.c.bf16 %v494, %v494
    %v545 = vpack.c.bf16 %v495, %v495
    %v546 = vpack.c.bf16 %v496, %v496
    %v547 = vpack.c.bf16 %v497, %v497
    %v548 = vpack.c.bf16 %v498, %v498
    %v549 = vpack.c.bf16 %v499, %v499
    %vm550 = vcmask 125952
    %551 = vst.msk [vmem:[#allocation2] sm:$0xf] %vm550, %v500
    %552 = vst.msk [vmem:[#allocation2 + $0x4] sm:$0xf] %vm550, %v501
    %553 = vst.msk [vmem:[#allocation2 + $0x8] sm:$0xf] %vm550, %v502
    %554 = vst.msk [vmem:[#allocation2 + $0xc] sm:$0xf] %vm550, %v503
    %555 = vst.msk [vmem:[#allocation2 + $0x10] sm:$0xf] %vm550, %v504
    %556 = vst.msk [vmem:[#allocation2 + $0x14] sm:$0xf] %vm550, %v505
    %557 = vst.msk [vmem:[#allocation2 + $0x18] sm:$0xf] %vm550, %v506
    %558 = vst.msk [vmem:[#allocation2 + $0x1c] sm:$0xf] %vm550, %v507
    %559 = vst.msk [vmem:[#allocation2 + $0x20] sm:$0xf] %vm550, %v508
    %560 = vst.msk [vmem:[#allocation2 + $0x24] sm:$0xf] %vm550, %v509
    %561 = vst.msk [vmem:[#allocation2 + $0x28] sm:$0xf] %vm550, %v510
    %562 = vst.msk [vmem:[#allocation2 + $0x2c] sm:$0xf] %vm550, %v511
    %563 = vst.msk [vmem:[#allocation2 + $0x30] sm:$0xf] %vm550, %v512
    %564 = vst.msk [vmem:[#allocation2 + $0x34] sm:$0xf] %vm550, %v513
    %565 = vst.msk [vmem:[#allocation2 + $0x38] sm:$0xf] %vm550, %v514
    %566 = vst.msk [vmem:[#allocation2 + $0x3c] sm:$0xf] %vm550, %v515
    %567 = vst.msk [vmem:[#allocation2 + $0x40] sm:$0xf] %vm550, %v516
    %568 = vst.msk [vmem:[#allocation2 + $0x44] sm:$0xf] %vm550, %v517
    %569 = vst.msk [vmem:[#allocation2 + $0x48] sm:$0xf] %vm550, %v518
    %570 = vst.msk [vmem:[#allocation2 + $0x4c] sm:$0xf] %vm550, %v519
    %571 = vst.msk [vmem:[#allocation2 + $0x50] sm:$0xf] %vm550, %v520
    %572 = vst.msk [vmem:[#allocation2 + $0x54] sm:$0xf] %vm550, %v521
    %573 = vst.msk [vmem:[#allocation2 + $0x58] sm:$0xf] %vm550, %v522
    %574 = vst.msk [vmem:[#allocation2 + $0x5c] sm:$0xf] %vm550, %v523
    %575 = vst.msk [vmem:[#allocation2 + $0x60] sm:$0xf] %vm550, %v524
    %576 = vst.msk [vmem:[#allocation2 + $0x64] sm:$0xf] %vm550, %v525
    %577 = vst.msk [vmem:[#allocation2 + $0x68] sm:$0xf] %vm550, %v526
    %578 = vst.msk [vmem:[#allocation2 + $0x6c] sm:$0xf] %vm550, %v527
    %579 = vst.msk [vmem:[#allocation2 + $0x70] sm:$0xf] %vm550, %v528
    %580 = vst.msk [vmem:[#allocation2 + $0x74] sm:$0xf] %vm550, %v529
    %581 = vst.msk [vmem:[#allocation2 + $0x78] sm:$0xf] %vm550, %v530
    %582 = vst.msk [vmem:[#allocation2 + $0x7c] sm:$0xf] %vm550, %v531
    %583 = vst.msk [vmem:[#allocation2 + $0x80] sm:$0xf] %vm550, %v532
    %584 = vst.msk [vmem:[#allocation2 + $0x84] sm:$0xf] %vm550, %v533
    %585 = vst.msk [vmem:[#allocation2 + $0x88] sm:$0xf] %vm550, %v534
    %586 = vst.msk [vmem:[#allocation2 + $0x8c] sm:$0xf] %vm550, %v535
    %587 = vst.msk [vmem:[#allocation2 + $0x90] sm:$0xf] %vm550, %v536
    %588 = vst.msk [vmem:[#allocation2 + $0x94] sm:$0xf] %vm550, %v537
    %589 = vst.msk [vmem:[#allocation2 + $0x98] sm:$0xf] %vm550, %v538
    %590 = vst.msk [vmem:[#allocation2 + $0x9c] sm:$0xf] %vm550, %v539
    %591 = vst.msk [vmem:[#allocation2 + $0xa0] sm:$0xf] %vm550, %v540
    %592 = vst.msk [vmem:[#allocation2 + $0xa4] sm:$0xf] %vm550, %v541
    %593 = vst.msk [vmem:[#allocation2 + $0xa8] sm:$0xf] %vm550, %v542
    %594 = vst.msk [vmem:[#allocation2 + $0xac] sm:$0xf] %vm550, %v543
    %595 = vst.msk [vmem:[#allocation2 + $0xb0] sm:$0xf] %vm550, %v544
    %596 = vst.msk [vmem:[#allocation2 + $0xb4] sm:$0xf] %vm550, %v545
    %597 = vst.msk [vmem:[#allocation2 + $0xb8] sm:$0xf] %vm550, %v546
    %598 = vst.msk [vmem:[#allocation2 + $0xbc] sm:$0xf] %vm550, %v547
    %599 = vst.msk [vmem:[#allocation2 + $0xc0] sm:$0xf] %vm550, %v548
    %600 = vst.msk [vmem:[#allocation2 + $0xc4] sm:$0xf] %vm550, %v549
    // Predicated region
    $region14: #{dqn_forward.3} parent=1 // pred_check
      _
    $region15: #{dqn_forward.3} parent=1 // pred_check_branch
      %602 = sbr.rel (0) target = $region17
    $region16: #{dqn_forward.3} parent=1 // pred_region
      // Predicated region
      $region18: #{dqn_forward.3} parent=16 // pred_check
        _
      $region19: #{dqn_forward.3} parent=16 // pred_check_branch
        %604 = sbr.rel (0) target = $region21
      $region20: #{dqn_forward.3} parent=16 // pred_region
        // Predicated region
        $region22: #{dqn_forward.3} parent=20 // pred_check
          _
        $region23: #{dqn_forward.3} parent=20 // pred_check_branch
          %606 = sbr.rel target = $region25
        $region24: #{dqn_forward.3} parent=20 // pred_region
          // Predicated region
          $region37: #{dqn_forward.3} parent=24 // pred_check
            _
          $region38: #{dqn_forward.3} parent=24 // pred_check_branch
            %718 = sbr.rel (0) target = $region40
          $region39: #{dqn_forward.3} parent=24 // pred_region
            loop: start=0, step=1, limit=1
            $region41: #{dqn_forward.3} parent=39 // loop_pre_header
              _
            $region42: #{dqn_forward.3} parent=39 // loop_header
              %s720 = sphi 0, %s724
              %p721 = scmp.ge.s32.totalorder %s720, 1
              %s725 = sphi [#allocation2], [#allocation2]
              %s726 = sphi %s3, %s3
            $region43: #{dqn_forward.3} parent=39 // loop_header_branch
              %723 = sbr.rel (%p721) target = $region47
            $region44: #{dqn_forward.3} parent=39 // loop_body
              _
            $region45: #{dqn_forward.3} parent=39 // loop_footer
              %s724 = sadd.s32 1, %s720
            $region46: #{dqn_forward.3} parent=39 // loop_footer_branch
              %719 = sbr.rel target = $region42
            $region47: #{dqn_forward.3} parent=39 // loop_exit
              _
            %s728 = ssub.s32 16, 1
            loop: start=0, step=1, limit=1
            $region48: #{dqn_forward.3} parent=39 // loop_pre_header
              _
            $region49: #{dqn_forward.3} parent=39 // loop_header
              %s730 = sphi 0, %s734
              %p731 = scmp.ge.s32.totalorder %s730, 1
              %s735 = sphi [#allocation2], [#allocation2]
              %s736 = sphi %s3, %s3
            $region50: #{dqn_forward.3} parent=39 // loop_header_branch
              %733 = sbr.rel (%p731) target = $region54
            $region51: #{dqn_forward.3} parent=39 // loop_body
              %v737 = vld [vmem:[%s735] sm:%s728]
              %738 = vst [vmem:[%s736] sm:%s728] %v737
              %v739 = vld [vmem:[%s735 + $0x4] sm:%s728]
              %740 = vst [vmem:[%s736 + $0x4] sm:%s728] %v739
              %v741 = vld [vmem:[%s735 + $0x8] sm:%s728]
              %742 = vst [vmem:[%s736 + $0x8] sm:%s728] %v741
              %v743 = vld [vmem:[%s735 + $0xc] sm:%s728]
              %744 = vst [vmem:[%s736 + $0xc] sm:%s728] %v743
              %v745 = vld [vmem:[%s735 + $0x10] sm:%s728]
              %746 = vst [vmem:[%s736 + $0x10] sm:%s728] %v745
              %v747 = vld [vmem:[%s735 + $0x14] sm:%s728]
              %748 = vst [vmem:[%s736 + $0x14] sm:%s728] %v747
              %v749 = vld [vmem:[%s735 + $0x18] sm:%s728]
              %750 = vst [vmem:[%s736 + $0x18] sm:%s728] %v749
              %v751 = vld [vmem:[%s735 + $0x1c] sm:%s728]
              %752 = vst [vmem:[%s736 + $0x1c] sm:%s728] %v751
              %v753 = vld [vmem:[%s735 + $0x20] sm:%s728]
              %754 = vst [vmem:[%s736 + $0x20] sm:%s728] %v753
              %v755 = vld [vmem:[%s735 + $0x24] sm:%s728]
              %756 = vst [vmem:[%s736 + $0x24] sm:%s728] %v755
              %v757 = vld [vmem:[%s735 + $0x28] sm:%s728]
              %758 = vst [vmem:[%s736 + $0x28] sm:%s728] %v757
              %v759 = vld [vmem:[%s735 + $0x2c] sm:%s728]
              %760 = vst [vmem:[%s736 + $0x2c] sm:%s728] %v759
              %v761 = vld [vmem:[%s735 + $0x30] sm:%s728]
              %762 = vst [vmem:[%s736 + $0x30] sm:%s728] %v761
              %v763 = vld [vmem:[%s735 + $0x34] sm:%s728]
              %764 = vst [vmem:[%s736 + $0x34] sm:%s728] %v763
              %v765 = vld [vmem:[%s735 + $0x38] sm:%s728]
              %766 = vst [vmem:[%s736 + $0x38] sm:%s728] %v765
              %v767 = vld [vmem:[%s735 + $0x3c] sm:%s728]
              %768 = vst [vmem:[%s736 + $0x3c] sm:%s728] %v767
              %v769 = vld [vmem:[%s735 + $0x40] sm:%s728]
              %770 = vst [vmem:[%s736 + $0x40] sm:%s728] %v769
              %v771 = vld [vmem:[%s735 + $0x44] sm:%s728]
              %772 = vst [vmem:[%s736 + $0x44] sm:%s728] %v771
              %v773 = vld [vmem:[%s735 + $0x48] sm:%s728]
              %774 = vst [vmem:[%s736 + $0x48] sm:%s728] %v773
              %v775 = vld [vmem:[%s735 + $0x4c] sm:%s728]
              %776 = vst [vmem:[%s736 + $0x4c] sm:%s728] %v775
              %v777 = vld [vmem:[%s735 + $0x50] sm:%s728]
              %778 = vst [vmem:[%s736 + $0x50] sm:%s728] %v777
              %v779 = vld [vmem:[%s735 + $0x54] sm:%s728]
              %780 = vst [vmem:[%s736 + $0x54] sm:%s728] %v779
              %v781 = vld [vmem:[%s735 + $0x58] sm:%s728]
              %782 = vst [vmem:[%s736 + $0x58] sm:%s728] %v781
              %v783 = vld [vmem:[%s735 + $0x5c] sm:%s728]
              %784 = vst [vmem:[%s736 + $0x5c] sm:%s728] %v783
              %v785 = vld [vmem:[%s735 + $0x60] sm:%s728]
              %786 = vst [vmem:[%s736 + $0x60] sm:%s728] %v785
              %v787 = vld [vmem:[%s735 + $0x64] sm:%s728]
              %788 = vst [vmem:[%s736 + $0x64] sm:%s728] %v787
              %v789 = vld [vmem:[%s735 + $0x68] sm:%s728]
              %790 = vst [vmem:[%s736 + $0x68] sm:%s728] %v789
              %v791 = vld [vmem:[%s735 + $0x6c] sm:%s728]
              %792 = vst [vmem:[%s736 + $0x6c] sm:%s728] %v791
              %v793 = vld [vmem:[%s735 + $0x70] sm:%s728]
              %794 = vst [vmem:[%s736 + $0x70] sm:%s728] %v793
              %v795 = vld [vmem:[%s735 + $0x74] sm:%s728]
              %796 = vst [vmem:[%s736 + $0x74] sm:%s728] %v795
              %v797 = vld [vmem:[%s735 + $0x78] sm:%s728]
              %798 = vst [vmem:[%s736 + $0x78] sm:%s728] %v797
              %v799 = vld [vmem:[%s735 + $0x7c] sm:%s728]
              %800 = vst [vmem:[%s736 + $0x7c] sm:%s728] %v799
              %v801 = vld [vmem:[%s735 + $0x80] sm:%s728]
              %802 = vst [vmem:[%s736 + $0x80] sm:%s728] %v801
              %v803 = vld [vmem:[%s735 + $0x84] sm:%s728]
              %804 = vst [vmem:[%s736 + $0x84] sm:%s728] %v803
              %v805 = vld [vmem:[%s735 + $0x88] sm:%s728]
              %806 = vst [vmem:[%s736 + $0x88] sm:%s728] %v805
              %v807 = vld [vmem:[%s735 + $0x8c] sm:%s728]
              %808 = vst [vmem:[%s736 + $0x8c] sm:%s728] %v807
              %v809 = vld [vmem:[%s735 + $0x90] sm:%s728]
              %810 = vst [vmem:[%s736 + $0x90] sm:%s728] %v809
              %v811 = vld [vmem:[%s735 + $0x94] sm:%s728]
              %812 = vst [vmem:[%s736 + $0x94] sm:%s728] %v811
              %v813 = vld [vmem:[%s735 + $0x98] sm:%s728]
              %814 = vst [vmem:[%s736 + $0x98] sm:%s728] %v813
              %v815 = vld [vmem:[%s735 + $0x9c] sm:%s728]
              %816 = vst [vmem:[%s736 + $0x9c] sm:%s728] %v815
              %v817 = vld [vmem:[%s735 + $0xa0] sm:%s728]
              %818 = vst [vmem:[%s736 + $0xa0] sm:%s728] %v817
              %v819 = vld [vmem:[%s735 + $0xa4] sm:%s728]
              %820 = vst [vmem:[%s736 + $0xa4] sm:%s728] %v819
              %v821 = vld [vmem:[%s735 + $0xa8] sm:%s728]
              %822 = vst [vmem:[%s736 + $0xa8] sm:%s728] %v821
              %v823 = vld [vmem:[%s735 + $0xac] sm:%s728]
              %824 = vst [vmem:[%s736 + $0xac] sm:%s728] %v823
              %v825 = vld [vmem:[%s735 + $0xb0] sm:%s728]
              %826 = vst [vmem:[%s736 + $0xb0] sm:%s728] %v825
              %v827 = vld [vmem:[%s735 + $0xb4] sm:%s728]
              %828 = vst [vmem:[%s736 + $0xb4] sm:%s728] %v827
              %v829 = vld [vmem:[%s735 + $0xb8] sm:%s728]
              %830 = vst [vmem:[%s736 + $0xb8] sm:%s728] %v829
              %v831 = vld [vmem:[%s735 + $0xbc] sm:%s728]
              %832 = vst [vmem:[%s736 + $0xbc] sm:%s728] %v831
              %v833 = vld [vmem:[%s735 + $0xc0] sm:%s728]
              %834 = vst [vmem:[%s736 + $0xc0] sm:%s728] %v833
            $region52: #{dqn_forward.3} parent=39 // loop_footer
              %s734 = sadd.s32 1, %s730
            $region53: #{dqn_forward.3} parent=39 // loop_footer_branch
              %729 = sbr.rel target = $region49
            $region54: #{dqn_forward.3} parent=39 // loop_exit
              _
          $region40: #{dqn_forward.3} parent=24 // pred_fallthru
            _
        $region25: #{dqn_forward.3} parent=20 // pred_fallthru
          _
        // Predicated region
        $region26: #{dqn_forward.3} parent=20 // pred_check
          _
        $region27: #{dqn_forward.3} parent=20 // pred_check_branch
          %608 = sbr.rel (0) target = $region29
        $region28: #{dqn_forward.3} parent=20 // pred_region
          %s610 = ssub.s32 16, 1
          loop: start=0, step=1, limit=1
          $region30: #{dqn_forward.3} parent=28 // loop_pre_header
            _
          $region31: #{dqn_forward.3} parent=28 // loop_header
            %s612 = sphi 0, %s616
            %p613 = scmp.ge.s32.totalorder %s612, 1
            %s617 = sphi [#allocation2], [#allocation2]
            %s618 = sphi %s3, %s3
          $region32: #{dqn_forward.3} parent=28 // loop_header_branch
            %615 = sbr.rel (%p613) target = $region36
          $region33: #{dqn_forward.3} parent=28 // loop_body
            %v619 = vld [vmem:[%s617] sm:%s610]
            %620 = vst [vmem:[%s618] sm:%s610] %v619
            %v621 = vld [vmem:[%s617 + $0x4] sm:%s610]
            %622 = vst [vmem:[%s618 + $0x4] sm:%s610] %v621
            %v623 = vld [vmem:[%s617 + $0x8] sm:%s610]
            %624 = vst [vmem:[%s618 + $0x8] sm:%s610] %v623
            %v625 = vld [vmem:[%s617 + $0xc] sm:%s610]
            %626 = vst [vmem:[%s618 + $0xc] sm:%s610] %v625
            %v627 = vld [vmem:[%s617 + $0x10] sm:%s610]
            %628 = vst [vmem:[%s618 + $0x10] sm:%s610] %v627
            %v629 = vld [vmem:[%s617 + $0x14] sm:%s610]
            %630 = vst [vmem:[%s618 + $0x14] sm:%s610] %v629
            %v631 = vld [vmem:[%s617 + $0x18] sm:%s610]
            %632 = vst [vmem:[%s618 + $0x18] sm:%s610] %v631
            %v633 = vld [vmem:[%s617 + $0x1c] sm:%s610]
            %634 = vst [vmem:[%s618 + $0x1c] sm:%s610] %v633
            %v635 = vld [vmem:[%s617 + $0x20] sm:%s610]
            %636 = vst [vmem:[%s618 + $0x20] sm:%s610] %v635
            %v637 = vld [vmem:[%s617 + $0x24] sm:%s610]
            %638 = vst [vmem:[%s618 + $0x24] sm:%s610] %v637
            %v639 = vld [vmem:[%s617 + $0x28] sm:%s610]
            %640 = vst [vmem:[%s618 + $0x28] sm:%s610] %v639
            %v641 = vld [vmem:[%s617 + $0x2c] sm:%s610]
            %642 = vst [vmem:[%s618 + $0x2c] sm:%s610] %v641
            %v643 = vld [vmem:[%s617 + $0x30] sm:%s610]
            %644 = vst [vmem:[%s618 + $0x30] sm:%s610] %v643
            %v645 = vld [vmem:[%s617 + $0x34] sm:%s610]
            %646 = vst [vmem:[%s618 + $0x34] sm:%s610] %v645
            %v647 = vld [vmem:[%s617 + $0x38] sm:%s610]
            %648 = vst [vmem:[%s618 + $0x38] sm:%s610] %v647
            %v649 = vld [vmem:[%s617 + $0x3c] sm:%s610]
            %650 = vst [vmem:[%s618 + $0x3c] sm:%s610] %v649
            %v651 = vld [vmem:[%s617 + $0x40] sm:%s610]
            %652 = vst [vmem:[%s618 + $0x40] sm:%s610] %v651
            %v653 = vld [vmem:[%s617 + $0x44] sm:%s610]
            %654 = vst [vmem:[%s618 + $0x44] sm:%s610] %v653
            %v655 = vld [vmem:[%s617 + $0x48] sm:%s610]
            %656 = vst [vmem:[%s618 + $0x48] sm:%s610] %v655
            %v657 = vld [vmem:[%s617 + $0x4c] sm:%s610]
            %658 = vst [vmem:[%s618 + $0x4c] sm:%s610] %v657
            %v659 = vld [vmem:[%s617 + $0x50] sm:%s610]
            %660 = vst [vmem:[%s618 + $0x50] sm:%s610] %v659
            %v661 = vld [vmem:[%s617 + $0x54] sm:%s610]
            %662 = vst [vmem:[%s618 + $0x54] sm:%s610] %v661
            %v663 = vld [vmem:[%s617 + $0x58] sm:%s610]
            %664 = vst [vmem:[%s618 + $0x58] sm:%s610] %v663
            %v665 = vld [vmem:[%s617 + $0x5c] sm:%s610]
            %666 = vst [vmem:[%s618 + $0x5c] sm:%s610] %v665
            %v667 = vld [vmem:[%s617 + $0x60] sm:%s610]
            %668 = vst [vmem:[%s618 + $0x60] sm:%s610] %v667
            %v669 = vld [vmem:[%s617 + $0x64] sm:%s610]
            %670 = vst [vmem:[%s618 + $0x64] sm:%s610] %v669
            %v671 = vld [vmem:[%s617 + $0x68] sm:%s610]
            %672 = vst [vmem:[%s618 + $0x68] sm:%s610] %v671
            %v673 = vld [vmem:[%s617 + $0x6c] sm:%s610]
            %674 = vst [vmem:[%s618 + $0x6c] sm:%s610] %v673
            %v675 = vld [vmem:[%s617 + $0x70] sm:%s610]
            %676 = vst [vmem:[%s618 + $0x70] sm:%s610] %v675
            %v677 = vld [vmem:[%s617 + $0x74] sm:%s610]
            %678 = vst [vmem:[%s618 + $0x74] sm:%s610] %v677
            %v679 = vld [vmem:[%s617 + $0x78] sm:%s610]
            %680 = vst [vmem:[%s618 + $0x78] sm:%s610] %v679
            %v681 = vld [vmem:[%s617 + $0x7c] sm:%s610]
            %682 = vst [vmem:[%s618 + $0x7c] sm:%s610] %v681
            %v683 = vld [vmem:[%s617 + $0x80] sm:%s610]
            %684 = vst [vmem:[%s618 + $0x80] sm:%s610] %v683
            %v685 = vld [vmem:[%s617 + $0x84] sm:%s610]
            %686 = vst [vmem:[%s618 + $0x84] sm:%s610] %v685
            %v687 = vld [vmem:[%s617 + $0x88] sm:%s610]
            %688 = vst [vmem:[%s618 + $0x88] sm:%s610] %v687
            %v689 = vld [vmem:[%s617 + $0x8c] sm:%s610]
            %690 = vst [vmem:[%s618 + $0x8c] sm:%s610] %v689
            %v691 = vld [vmem:[%s617 + $0x90] sm:%s610]
            %692 = vst [vmem:[%s618 + $0x90] sm:%s610] %v691
            %v693 = vld [vmem:[%s617 + $0x94] sm:%s610]
            %694 = vst [vmem:[%s618 + $0x94] sm:%s610] %v693
            %v695 = vld [vmem:[%s617 + $0x98] sm:%s610]
            %696 = vst [vmem:[%s618 + $0x98] sm:%s610] %v695
            %v697 = vld [vmem:[%s617 + $0x9c] sm:%s610]
            %698 = vst [vmem:[%s618 + $0x9c] sm:%s610] %v697
            %v699 = vld [vmem:[%s617 + $0xa0] sm:%s610]
            %700 = vst [vmem:[%s618 + $0xa0] sm:%s610] %v699
            %v701 = vld [vmem:[%s617 + $0xa4] sm:%s610]
            %702 = vst [vmem:[%s618 + $0xa4] sm:%s610] %v701
            %v703 = vld [vmem:[%s617 + $0xa8] sm:%s610]
            %704 = vst [vmem:[%s618 + $0xa8] sm:%s610] %v703
            %v705 = vld [vmem:[%s617 + $0xac] sm:%s610]
            %706 = vst [vmem:[%s618 + $0xac] sm:%s610] %v705
            %v707 = vld [vmem:[%s617 + $0xb0] sm:%s610]
            %708 = vst [vmem:[%s618 + $0xb0] sm:%s610] %v707
            %v709 = vld [vmem:[%s617 + $0xb4] sm:%s610]
            %710 = vst [vmem:[%s618 + $0xb4] sm:%s610] %v709
            %v711 = vld [vmem:[%s617 + $0xb8] sm:%s610]
            %712 = vst [vmem:[%s618 + $0xb8] sm:%s610] %v711
            %v713 = vld [vmem:[%s617 + $0xbc] sm:%s610]
            %714 = vst [vmem:[%s618 + $0xbc] sm:%s610] %v713
            %v715 = vld [vmem:[%s617 + $0xc0] sm:%s610]
            %716 = vst [vmem:[%s618 + $0xc0] sm:%s610] %v715
          $region34: #{dqn_forward.3} parent=28 // loop_footer
            %s616 = sadd.s32 1, %s612
          $region35: #{dqn_forward.3} parent=28 // loop_footer_branch
            %611 = sbr.rel target = $region31
          $region36: #{dqn_forward.3} parent=28 // loop_exit
            _
        $region29: #{dqn_forward.3} parent=20 // pred_fallthru
          _
      $region21: #{dqn_forward.3} parent=16 // pred_fallthru
        _
      %835 = vnop
    $region17: #{dqn_forward.3} parent=1 // pred_fallthru
      _
    // Predicated region
    $region55: #{dqn_forward.3} parent=1 // pred_check
      _
    $region56: #{dqn_forward.3} parent=1 // pred_check_branch
      %837 = sbr.rel (0) target = $region58
    $region57: #{dqn_forward.3} parent=1 // pred_region
      _
    $region58: #{dqn_forward.3} parent=1 // pred_fallthru
      _

// kernel: dqn_forward.4
$region0: #{dqn_forward.4}
  #allocation0 [shape = 'u32[]', space=smem, size = 0x4, offset = 0x4, fixed_abs, tag = 'smem constant byte address 0x4 - core index']
  #allocation1 [shape = 'u32[72,128]{1,0:T(1,128)}', space=vmem, size = 0x9000, scoped, tag = 'internal scratch']
  %s0 = inlined_call_operand.vmem [shape: bf16[50,400], index: 0, kind: input, shape index: {}]
  %s1 = inlined_call_operand.vmem [shape: bf16[400,32], index: 1, kind: input, shape index: {}]
  %s2 = inlined_call_operand.vmem [shape: f32[1,32], index: 2, kind: input, shape index: {}]
  %s3 = inlined_call_operand.vmem [shape: bf16[50,32], index: 3, kind: output, shape index: {}]
  %s4 = sld [smem:[#allocation0]]
  $region59: #{dqn_forward.4} parent=0
    _
  %s6 = ssub.s32 1, %s4
  %s7 = scalar_select 0, %s6, %s4
  $region1: #{dqn_forward.4} parent=0
    #allocation2 [shape = 'u8[16384]{0}', space=vmem, size = 0x4000, scoped, tag = 'output window, operand 0, single buffered']
    // Predicated region
    $region2: #{dqn_forward.4} parent=1 // pred_check
      _
    $region3: #{dqn_forward.4} parent=1 // pred_check_branch
      %9 = sbr.rel (0) target = $region5
    $region4: #{dqn_forward.4} parent=1 // pred_region
      _
    $region5: #{dqn_forward.4} parent=1 // pred_fallthru
      _
    // Predicated region
    $region6: #{dqn_forward.4} parent=1 // pred_check
      _
    $region7: #{dqn_forward.4} parent=1 // pred_check_branch
      %11 = sbr.rel (0) target = $region9
    $region8: #{dqn_forward.4} parent=1 // pred_region
      _
    $region9: #{dqn_forward.4} parent=1 // pred_fallthru
      _
    // Predicated region
    $region10: #{dqn_forward.4} parent=1 // pred_check
      _
    $region11: #{dqn_forward.4} parent=1 // pred_check_branch
      %13 = sbr.rel (0) target = $region13
    $region12: #{dqn_forward.4} parent=1 // pred_region
      _
    $region13: #{dqn_forward.4} parent=1 // pred_fallthru
      _
    %v15 = vld [vmem:[%s0] sm:$0xff]
    %v16 = vld [vmem:[%s0 + $0x8] sm:$0xff]
    %v17 = vld [vmem:[%s0 + $0x10] sm:$0xff]
    %v18 = vld [vmem:[%s0 + $0x18] sm:$0xff]
    %v19 = vld [vmem:[%s0 + $0x20] sm:$0xff]
    %v20 = vld [vmem:[%s0 + $0x28] sm:$0xff]
    %v21 = vld [vmem:[%s0 + $0x30] sm:$0xff]
    %v22 = vld [vmem:[%s0 + $0x38] sm:$0xff]
    %v23 = vld [vmem:[%s0 + $0x40] sm:$0xff]
    %v24 = vld [vmem:[%s0 + $0x48] sm:$0xff]
    %v25 = vld [vmem:[%s0 + $0x50] sm:$0xff]
    %v26 = vld [vmem:[%s0 + $0x58] sm:$0xff]
    %v27 = vld [vmem:[%s0 + $0x60] sm:$0xff]
    %v28 = vld [vmem:[%s0 + $0x68] sm:$0xff]
    %v29 = vld [vmem:[%s0 + $0x70] sm:$0xff]
    %v30 = vld [vmem:[%s0 + $0x78] sm:$0xff]
    %v31 = vld [vmem:[%s1] sm:$0xf]
    %v32 = vld [vmem:[%s1 + $0x4] sm:$0xf]
    %v33 = vld [vmem:[%s1 + $0x8] sm:$0xf]
    %v34 = vld [vmem:[%s1 + $0xc] sm:$0xf]
    %v35 = vld [vmem:[%s1 + $0x10] sm:$0xf]
    %v36 = vld [vmem:[%s1 + $0x14] sm:$0xf]
    %v37 = vld [vmem:[%s1 + $0x18] sm:$0xf]
    %v38 = vld [vmem:[%s1 + $0x1c] sm:$0xf]
    %v39 = vld [vmem:[%s1 + $0x20] sm:$0xf]
    %v40 = vld [vmem:[%s1 + $0x24] sm:$0xf]
    %v41 = vld [vmem:[%s1 + $0x28] sm:$0xf]
    %v42 = vld [vmem:[%s1 + $0x2c] sm:$0xf]
    %v43 = vld [vmem:[%s1 + $0x30] sm:$0xf]
    %v44 = vld [vmem:[%s1 + $0x34] sm:$0xf]
    %v45 = vld [vmem:[%s1 + $0x38] sm:$0xf]
    %v46 = vld [vmem:[%s1 + $0x3c] sm:$0xf]
    %v47 = vld [vmem:[%s1 + $0x40] sm:$0xf]
    %v48 = vld [vmem:[%s1 + $0x44] sm:$0xf]
    %v49 = vld [vmem:[%s1 + $0x48] sm:$0xf]
    %v50 = vld [vmem:[%s1 + $0x4c] sm:$0xf]
    %v51 = vld [vmem:[%s1 + $0x50] sm:$0xf]
    %v52 = vld [vmem:[%s1 + $0x54] sm:$0xf]
    %v53 = vld [vmem:[%s1 + $0x58] sm:$0xf]
    %v54 = vld [vmem:[%s1 + $0x5c] sm:$0xf]
    %v55 = vld [vmem:[%s1 + $0x60] sm:$0xf]
    %v56 = vld [vmem:[%s1 + $0x64] sm:$0xf]
    %v57 = vld [vmem:[%s1 + $0x68] sm:$0xf]
    %v58 = vld [vmem:[%s1 + $0x6c] sm:$0xf]
    %v59 = vld [vmem:[%s1 + $0x70] sm:$0xf]
    %v60 = vld [vmem:[%s1 + $0x74] sm:$0xf]
    %v61 = vld [vmem:[%s1 + $0x78] sm:$0xf]
    %v62 = vld [vmem:[%s1 + $0x7c] sm:$0xf]
    %v63 = vld [vmem:[%s1 + $0x80] sm:$0xf]
    %v64 = vld [vmem:[%s1 + $0x84] sm:$0xf]
    %v65 = vld [vmem:[%s1 + $0x88] sm:$0xf]
    %v66 = vld [vmem:[%s1 + $0x8c] sm:$0xf]
    %v67 = vld [vmem:[%s1 + $0x90] sm:$0xf]
    %v68 = vld [vmem:[%s1 + $0x94] sm:$0xf]
    %v69 = vld [vmem:[%s1 + $0x98] sm:$0xf]
    %v70 = vld [vmem:[%s1 + $0x9c] sm:$0xf]
    %v71 = vld [vmem:[%s1 + $0xa0] sm:$0xf]
    %v72 = vld [vmem:[%s1 + $0xa4] sm:$0xf]
    %v73 = vld [vmem:[%s1 + $0xa8] sm:$0xf]
    %v74 = vld [vmem:[%s1 + $0xac] sm:$0xf]
    %v75 = vld [vmem:[%s1 + $0xb0] sm:$0xf]
    %v76 = vld [vmem:[%s1 + $0xb4] sm:$0xf]
    %v77 = vld [vmem:[%s1 + $0xb8] sm:$0xf]
    %v78 = vld [vmem:[%s1 + $0xbc] sm:$0xf]
    %v79 = vld [vmem:[%s1 + $0xc0] sm:$0xf]
    %v80 = vld [vmem:[%s1 + $0xc4] sm:$0xf]
    %v81 = vld [vmem:[%s2] sm:$0x1]
    %v83 = vperm.slane %v81, 0
    %v101 = vunpack.c.l.b16 %v15
    %v102 = vunpack.c.h.b16 %v15
    %v103 = vunpack.c.l.b16 %v16
    %v104 = vunpack.c.h.b16 %v16
    %v105 = vunpack.c.l.b16 %v17
    %v106 = vunpack.c.h.b16 %v17
    %v107 = vunpack.c.l.b16 %v18
    %v108 = vunpack.c.h.b16 %v18
    %v109 = vunpack.c.l.b16 %v19
    %v110 = vunpack.c.h.b16 %v19
    %v111 = vunpack.c.l.b16 %v20
    %v112 = vunpack.c.h.b16 %v20
    %v113 = vunpack.c.l.b16 %v21
    %v114 = vunpack.c.h.b16 %v21
    %v115 = vunpack.c.l.b16 %v22
    %v116 = vunpack.c.h.b16 %v22
    %v117 = vunpack.c.l.b16 %v23
    %v118 = vunpack.c.h.b16 %v23
    %v119 = vunpack.c.l.b16 %v24
    %v120 = vunpack.c.h.b16 %v24
    %v121 = vunpack.c.l.b16 %v25
    %v122 = vunpack.c.h.b16 %v25
    %v123 = vunpack.c.l.b16 %v26
    %v124 = vunpack.c.h.b16 %v26
    %v125 = vunpack.c.l.b16 %v27
    %v126 = vunpack.c.h.b16 %v27
    %v127 = vunpack.c.l.b16 %v28
    %v128 = vunpack.c.h.b16 %v28
    %v129 = vunpack.c.l.b16 %v29
    %v130 = vunpack.c.h.b16 %v29
    %v131 = vunpack.c.l.b16 %v30
    %v132 = vunpack.c.h.b16 %v30
    %v133 = vpack.c.b16 %v105, %v101
    %v134 = vpack.c.b16 %v106, %v102
    %v135 = vpack.c.b16 %v107, %v103
    %v136 = vpack.c.b16 %v108, %v104
    %v137 = vpack.c.b16 %v113, %v109
    %v138 = vpack.c.b16 %v114, %v110
    %v139 = vpack.c.b16 %v115, %v111
    %v140 = vpack.c.b16 %v116, %v112
    %v141 = vpack.c.b16 %v121, %v117
    %v142 = vpack.c.b16 %v122, %v118
    %v143 = vpack.c.b16 %v123, %v119
    %v144 = vpack.c.b16 %v124, %v120
    %v145 = vpack.c.b16 %v129, %v125
    %v146 = vpack.c.b16 %v130, %v126
    %v147 = vpack.c.b16 %v131, %v127
    %v148 = vpack.c.b16 %v132, %v128
    %v211 = vunpack.c.l.b16 %v31
    %v212 = vunpack.c.l.b16 %v32
    %v213 = vunpack.c.l.b16 %v33
    %v214 = vunpack.c.l.b16 %v34
    %v215 = vunpack.c.l.b16 %v35
    %v216 = vunpack.c.l.b16 %v36
    %v217 = vunpack.c.l.b16 %v37
    %v218 = vunpack.c.l.b16 %v38
    %v219 = vunpack.c.l.b16 %v39
    %v220 = vunpack.c.l.b16 %v40
    %v221 = vunpack.c.l.b16 %v41
    %v222 = vunpack.c.l.b16 %v42
    %v223 = vunpack.c.l.b16 %v43
    %v224 = vunpack.c.l.b16 %v44
    %v225 = vunpack.c.l.b16 %v45
    %v226 = vunpack.c.l.b16 %v46
    %v227 = vunpack.c.l.b16 %v47
    %v228 = vunpack.c.l.b16 %v48
    %v229 = vunpack.c.l.b16 %v49
    %v230 = vunpack.c.l.b16 %v50
    %v231 = vunpack.c.l.b16 %v51
    %v232 = vunpack.c.l.b16 %v52
    %v233 = vunpack.c.l.b16 %v53
    %v234 = vunpack.c.l.b16 %v54
    %v235 = vunpack.c.l.b16 %v55
    %v236 = vunpack.c.l.b16 %v56
    %v237 = vunpack.c.l.b16 %v57
    %v238 = vunpack.c.l.b16 %v58
    %v239 = vunpack.c.l.b16 %v59
    %v240 = vunpack.c.l.b16 %v60
    %v241 = vunpack.c.l.b16 %v61
    %v242 = vunpack.c.l.b16 %v62
    %v243 = vunpack.c.l.b16 %v63
    %v244 = vunpack.c.l.b16 %v64
    %v245 = vunpack.c.l.b16 %v65
    %v246 = vunpack.c.l.b16 %v66
    %v247 = vunpack.c.l.b16 %v67
    %v248 = vunpack.c.l.b16 %v68
    %v249 = vunpack.c.l.b16 %v69
    %v250 = vunpack.c.l.b16 %v70
    %v251 = vunpack.c.l.b16 %v71
    %v252 = vunpack.c.l.b16 %v72
    %v253 = vunpack.c.l.b16 %v73
    %v254 = vunpack.c.l.b16 %v74
    %v255 = vunpack.c.l.b16 %v75
    %v256 = vunpack.c.l.b16 %v76
    %v257 = vunpack.c.l.b16 %v77
    %v258 = vunpack.c.l.b16 %v78
    %v259 = vunpack.c.l.b16 %v79
    %v260 = vunpack.c.l.b16 %v80
    %v261 = vpack.c.b16 %v212, %v211
    %v262 = vpack.c.b16 %v214, %v213
    %v263 = vpack.c.b16 %v216, %v215
    %v264 = vpack.c.b16 %v218, %v217
    %v265 = vpack.c.b16 %v220, %v219
    %v266 = vpack.c.b16 %v222, %v221
    %v267 = vpack.c.b16 %v224, %v223
    %v268 = vpack.c.b16 %v226, %v225
    %v269 = vpack.c.b16 %v228, %v227
    %v270 = vpack.c.b16 %v230, %v229
    %v271 = vpack.c.b16 %v232, %v231
    %v272 = vpack.c.b16 %v234, %v233
    %v273 = vpack.c.b16 %v236, %v235
    %v274 = vpack.c.b16 %v238, %v237
    %v275 = vpack.c.b16 %v240, %v239
    %v276 = vpack.c.b16 %v242, %v241
    %v277 = vpack.c.b16 %v244, %v243
    %v278 = vpack.c.b16 %v246, %v245
    %v279 = vpack.c.b16 %v248, %v247
    %v280 = vpack.c.b16 %v250, %v249
    %v281 = vpack.c.b16 %v252, %v251
    %v282 = vpack.c.b16 %v254, %v253
    %v283 = vpack.c.b16 %v256, %v255
    %v284 = vpack.c.b16 %v258, %v257
    %v285 = vpack.c.b16 %v260, %v259
    %vm311 = vcmask 130048
    %v313 = vsel %vm311, %v136, 0
    %v316 = vsel %vm311, %v140, 0
    %v319 = vsel %vm311, %v144, 0
    %v322 = vsel %vm311, %v148, 0
    %324 = vmatpush.bf16.msra.mxu0 %v268
    %325 = vmatpush.bf16.msra.mxu0 %v267
    %326 = vmatpush.bf16.msra.mxu0 %v266
    %327 = vmatpush.bf16.msra.mxu0 %v265
    %328 = vmatpush.bf16.msra.mxu0 %v264
    %329 = vmatpush.bf16.msra.mxu0 %v263
    %330 = vmatpush.bf16.msra.mxu0 %v262
    %331 = vmatpush.bf16.msra.mxu0 %v261
    %332 = vmatmul.bf16.gmra.mxu0 %v133
    %v333 = vpop.f32.mrf.mxu0
    %v334 = vadd.f32 %v83, %v333
    %v335 = vpop.f32.mrf.mxu0
    %v336 = vadd.f32 %v83, %v335
    %337 = vmatmul.bf16.gmra.mxu0 %v137
    %v338 = vpop.f32.mrf.mxu0
    %v339 = vadd.f32 %v83, %v338
    %v340 = vpop.f32.mrf.mxu0
    %v341 = vadd.f32 %v83, %v340
    %342 = vmatmul.bf16.gmra.mxu0 %v141
    %v343 = vpop.f32.mrf.mxu0
    %v344 = vadd.f32 %v83, %v343
    %v345 = vpop.f32.mrf.mxu0
    %v346 = vadd.f32 %v83, %v345
    %347 = vmatmul.bf16.gmra.mxu0 %v145
    %v348 = vpop.f32.mrf.mxu0
    %v349 = vadd.f32 %v83, %v348
    %v350 = vpop.f32.mrf.mxu0
    %v351 = vadd.f32 %v83, %v350
    %352 = vdwg.mxu0
    %353 = vmatpush.bf16.msra.mxu0 %v276
    %354 = vmatpush.bf16.msra.mxu0 %v275
    %355 = vmatpush.bf16.msra.mxu0 %v274
    %356 = vmatpush.bf16.msra.mxu0 %v273
    %357 = vmatpush.bf16.msra.mxu0 %v272
    %358 = vmatpush.bf16.msra.mxu0 %v271
    %359 = vmatpush.bf16.msra.mxu0 %v270
    %360 = vmatpush.bf16.msra.mxu0 %v269
    %361 = vmatmul.bf16.gmra.mxu0 %v134
    %v362 = vpop.f32.mrf.mxu0
    %v363 = vadd.f32 %v334, %v362
    %v364 = vpop.f32.mrf.mxu0
    %v365 = vadd.f32 %v336, %v364
    %366 = vmatmul.bf16.gmra.mxu0 %v138
    %v367 = vpop.f32.mrf.mxu0
    %v368 = vadd.f32 %v339, %v367
    %v369 = vpop.f32.mrf.mxu0
    %v370 = vadd.f32 %v341, %v369
    %371 = vmatmul.bf16.gmra.mxu0 %v142
    %v372 = vpop.f32.mrf.mxu0
    %v373 = vadd.f32 %v344, %v372
    %v374 = vpop.f32.mrf.mxu0
    %v375 = vadd.f32 %v346, %v374
    %376 = vmatmul.bf16.gmra.mxu0 %v146
    %v377 = vpop.f32.mrf.mxu0
    %v378 = vadd.f32 %v349, %v377
    %v379 = vpop.f32.mrf.mxu0
    %v380 = vadd.f32 %v351, %v379
    %381 = vdwg.mxu0
    %382 = vmatpush.bf16.msra.mxu0 %v284
    %383 = vmatpush.bf16.msra.mxu0 %v283
    %384 = vmatpush.bf16.msra.mxu0 %v282
    %385 = vmatpush.bf16.msra.mxu0 %v281
    %386 = vmatpush.bf16.msra.mxu0 %v280
    %387 = vmatpush.bf16.msra.mxu0 %v279
    %388 = vmatpush.bf16.msra.mxu0 %v278
    %389 = vmatpush.bf16.msra.mxu0 %v277
    %390 = vmatmul.bf16.gmra.mxu0 %v135
    %v391 = vpop.f32.mrf.mxu0
    %v392 = vadd.f32 %v363, %v391
    %v393 = vpop.f32.mrf.mxu0
    %v394 = vadd.f32 %v365, %v393
    %395 = vmatmul.bf16.gmra.mxu0 %v139
    %v396 = vpop.f32.mrf.mxu0
    %v397 = vadd.f32 %v368, %v396
    %v398 = vpop.f32.mrf.mxu0
    %v399 = vadd.f32 %v370, %v398
    %400 = vmatmul.bf16.gmra.mxu0 %v143
    %v401 = vpop.f32.mrf.mxu0
    %v402 = vadd.f32 %v373, %v401
    %v403 = vpop.f32.mrf.mxu0
    %v404 = vadd.f32 %v375, %v403
    %405 = vmatmul.bf16.gmra.mxu0 %v147
    %v406 = vpop.f32.mrf.mxu0
    %v407 = vadd.f32 %v378, %v406
    %v408 = vpop.f32.mrf.mxu0
    %v409 = vadd.f32 %v380, %v408
    %410 = vdwg.mxu0
    %411 = vmatpush.bf16.msra.mxu0 0
    %412 = vmatpush.bf16.msra.mxu0 0
    %413 = vmatpush.bf16.msra.mxu0 0
    %414 = vmatpush.bf16.msra.mxu0 0
    %415 = vmatpush.bf16.msra.mxu0 0
    %416 = vmatpush.bf16.msra.mxu0 0
    %417 = vmatpush.bf16.msra.mxu0 0
    %418 = vmatpush.bf16.msra.mxu0 %v285
    %419 = vmatmul.bf16.gmra.mxu0 %v313
    %v420 = vpop.f32.mrf.mxu0
    %v421 = vadd.f32 %v392, %v420
    %v422 = vpop.f32.mrf.mxu0
    %v423 = vadd.f32 %v394, %v422
    %424 = vmatmul.bf16.gmra.mxu0 %v316
    %v425 = vpop.f32.mrf.mxu0
    %v426 = vadd.f32 %v397, %v425
    %v427 = vpop.f32.mrf.mxu0
    %v428 = vadd.f32 %v399, %v427
    %429 = vmatmul.bf16.gmra.mxu0 %v319
    %v430 = vpop.f32.mrf.mxu0
    %v431 = vadd.f32 %v402, %v430
    %v432 = vpop.f32.mrf.mxu0
    %v433 = vadd.f32 %v404, %v432
    %434 = vmatmul.bf16.gmra.mxu0 %v322
    %v435 = vpop.f32.mrf.mxu0
    %v436 = vadd.f32 %v407, %v435
    %v437 = vpop.f32.mrf.mxu0
    %v438 = vadd.f32 %v409, %v437
    %439 = vdwg.mxu0
    %v440 = vmax.f32 %v421, 0.0
    %v441 = vmax.f32 %v423, 0.0
    %v442 = vmax.f32 %v426, 0.0
    %v443 = vmax.f32 %v428, 0.0
    %v444 = vmax.f32 %v431, 0.0
    %v445 = vmax.f32 %v433, 0.0
    %v446 = vmax.f32 %v436, 0.0
    %v447 = vmax.f32 %v438, 0.0
    %v448 = vpack.c.bf16 %v440, %v440
    %v449 = vpack.c.bf16 %v441, %v441
    %v450 = vpack.c.bf16 %v442, %v442
    %v451 = vpack.c.bf16 %v443, %v443
    %v452 = vpack.c.bf16 %v444, %v444
    %v453 = vpack.c.bf16 %v445, %v445
    %v454 = vpack.c.bf16 %v446, %v446
    %v455 = vpack.c.bf16 %v447, %v447
    %vm456 = vcmask 257024
    %457 = vst.msk [vmem:[#allocation2] sm:$0xf] %vm456, %v448
    %458 = vst.msk [vmem:[#allocation2 + $0x4] sm:$0xf] %vm456, %v449
    %459 = vst.msk [vmem:[#allocation2 + $0x8] sm:$0xf] %vm456, %v450
    %460 = vst.msk [vmem:[#allocation2 + $0xc] sm:$0xf] %vm456, %v451
    %461 = vst.msk [vmem:[#allocation2 + $0x10] sm:$0xf] %vm456, %v452
    %462 = vst.msk [vmem:[#allocation2 + $0x14] sm:$0xf] %vm456, %v453
    %463 = vst.msk [vmem:[#allocation2 + $0x18] sm:$0xf] %vm456, %v454
    %464 = vst.msk [vmem:[#allocation2 + $0x1c] sm:$0xf] %vm456, %v455
    // Predicated region
    $region14: #{dqn_forward.4} parent=1 // pred_check
      _
    $region15: #{dqn_forward.4} parent=1 // pred_check_branch
      %466 = sbr.rel (0) target = $region17
    $region16: #{dqn_forward.4} parent=1 // pred_region
      // Predicated region
      $region18: #{dqn_forward.4} parent=16 // pred_check
        _
      $region19: #{dqn_forward.4} parent=16 // pred_check_branch
        %468 = sbr.rel (0) target = $region21
      $region20: #{dqn_forward.4} parent=16 // pred_region
        // Predicated region
        $region22: #{dqn_forward.4} parent=20 // pred_check
          _
        $region23: #{dqn_forward.4} parent=20 // pred_check_branch
          %470 = sbr.rel target = $region25
        $region24: #{dqn_forward.4} parent=20 // pred_region
          // Predicated region
          $region37: #{dqn_forward.4} parent=24 // pred_check
            _
          $region38: #{dqn_forward.4} parent=24 // pred_check_branch
            %498 = sbr.rel (0) target = $region40
          $region39: #{dqn_forward.4} parent=24 // pred_region
            loop: start=0, step=1, limit=1
            $region41: #{dqn_forward.4} parent=39 // loop_pre_header
              _
            $region42: #{dqn_forward.4} parent=39 // loop_header
              %s500 = sphi 0, %s504
              %p501 = scmp.ge.s32.totalorder %s500, 1
              %s505 = sphi [#allocation2], [#allocation2]
              %s506 = sphi %s3, %s3
            $region43: #{dqn_forward.4} parent=39 // loop_header_branch
              %503 = sbr.rel (%p501) target = $region47
            $region44: #{dqn_forward.4} parent=39 // loop_body
              _
            $region45: #{dqn_forward.4} parent=39 // loop_footer
              %s504 = sadd.s32 1, %s500
            $region46: #{dqn_forward.4} parent=39 // loop_footer_branch
              %499 = sbr.rel target = $region42
            $region47: #{dqn_forward.4} parent=39 // loop_exit
              _
            %s508 = ssub.s32 16, 1
            loop: start=0, step=1, limit=1
            $region48: #{dqn_forward.4} parent=39 // loop_pre_header
              _
            $region49: #{dqn_forward.4} parent=39 // loop_header
              %s510 = sphi 0, %s514
              %p511 = scmp.ge.s32.totalorder %s510, 1
              %s515 = sphi [#allocation2], [#allocation2]
              %s516 = sphi %s3, %s3
            $region50: #{dqn_forward.4} parent=39 // loop_header_branch
              %513 = sbr.rel (%p511) target = $region54
            $region51: #{dqn_forward.4} parent=39 // loop_body
              %v517 = vld [vmem:[%s515] sm:%s508]
              %518 = vst [vmem:[%s516] sm:%s508] %v517
              %v519 = vld [vmem:[%s515 + $0x4] sm:%s508]
              %520 = vst [vmem:[%s516 + $0x4] sm:%s508] %v519
              %v521 = vld [vmem:[%s515 + $0x8] sm:%s508]
              %522 = vst [vmem:[%s516 + $0x8] sm:%s508] %v521
              %v523 = vld [vmem:[%s515 + $0xc] sm:%s508]
              %524 = vst [vmem:[%s516 + $0xc] sm:%s508] %v523
              %v525 = vld [vmem:[%s515 + $0x10] sm:%s508]
              %526 = vst [vmem:[%s516 + $0x10] sm:%s508] %v525
              %v527 = vld [vmem:[%s515 + $0x14] sm:%s508]
              %528 = vst [vmem:[%s516 + $0x14] sm:%s508] %v527
              %v529 = vld [vmem:[%s515 + $0x18] sm:%s508]
              %530 = vst [vmem:[%s516 + $0x18] sm:%s508] %v529
            $region52: #{dqn_forward.4} parent=39 // loop_footer
              %s514 = sadd.s32 1, %s510
            $region53: #{dqn_forward.4} parent=39 // loop_footer_branch
              %509 = sbr.rel target = $region49
            $region54: #{dqn_forward.4} parent=39 // loop_exit
              _
          $region40: #{dqn_forward.4} parent=24 // pred_fallthru
            _
        $region25: #{dqn_forward.4} parent=20 // pred_fallthru
          _
        // Predicated region
        $region26: #{dqn_forward.4} parent=20 // pred_check
          _
        $region27: #{dqn_forward.4} parent=20 // pred_check_branch
          %472 = sbr.rel (0) target = $region29
        $region28: #{dqn_forward.4} parent=20 // pred_region
          %s474 = ssub.s32 16, 1
          loop: start=0, step=1, limit=1
          $region30: #{dqn_forward.4} parent=28 // loop_pre_header
            _
          $region31: #{dqn_forward.4} parent=28 // loop_header
            %s476 = sphi 0, %s480
            %p477 = scmp.ge.s32.totalorder %s476, 1
            %s481 = sphi [#allocation2], [#allocation2]
            %s482 = sphi %s3, %s3
          $region32: #{dqn_forward.4} parent=28 // loop_header_branch
            %479 = sbr.rel (%p477) target = $region36
          $region33: #{dqn_forward.4} parent=28 // loop_body
            %v483 = vld [vmem:[%s481] sm:%s474]
            %484 = vst [vmem:[%s482] sm:%s474] %v483
            %v485 = vld [vmem:[%s481 + $0x4] sm:%s474]
            %486 = vst [vmem:[%s482 + $0x4] sm:%s474] %v485
            %v487 = vld [vmem:[%s481 + $0x8] sm:%s474]
            %488 = vst [vmem:[%s482 + $0x8] sm:%s474] %v487
            %v489 = vld [vmem:[%s481 + $0xc] sm:%s474]
            %490 = vst [vmem:[%s482 + $0xc] sm:%s474] %v489
            %v491 = vld [vmem:[%s481 + $0x10] sm:%s474]
            %492 = vst [vmem:[%s482 + $0x10] sm:%s474] %v491
            %v493 = vld [vmem:[%s481 + $0x14] sm:%s474]
            %494 = vst [vmem:[%s482 + $0x14] sm:%s474] %v493
            %v495 = vld [vmem:[%s481 + $0x18] sm:%s474]
            %496 = vst [vmem:[%s482 + $0x18] sm:%s474] %v495
          $region34: #{dqn_forward.4} parent=28 // loop_footer
            %s480 = sadd.s32 1, %s476
          $region35: #{dqn_forward.4} parent=28 // loop_footer_branch
            %475 = sbr.rel target = $region31
          $region36: #{dqn_forward.4} parent=28 // loop_exit
            _
        $region29: #{dqn_forward.4} parent=20 // pred_fallthru
          _
      $region21: #{dqn_forward.4} parent=16 // pred_fallthru
        _
      %531 = vnop
    $region17: #{dqn_forward.4} parent=1 // pred_fallthru
      _
    // Predicated region
    $region55: #{dqn_forward.4} parent=1 // pred_check
      _
    $region56: #{dqn_forward.4} parent=1 // pred_check_branch
      %533 = sbr.rel (0) target = $region58
    $region57: #{dqn_forward.4} parent=1 // pred_region
      _
    $region58: #{dqn_forward.4} parent=1 // pred_fallthru
      _

// kernel: dqn_forward.5
$region0: #{dqn_forward.5}
  #allocation0 [shape = 'u32[]', space=smem, size = 0x4, offset = 0x4, fixed_abs, tag = 'smem constant byte address 0x4 - core index']
  #allocation1 [shape = 'u32[72,128]{1,0:T(1,128)}', space=vmem, size = 0x9000, scoped, tag = 'internal scratch']
  %s0 = inlined_call_operand.vmem [shape: bf16[2,800], index: 0, kind: input, shape index: {}]
  %s1 = inlined_call_operand.vmem [shape: bf16[800,32], index: 1, kind: input, shape index: {}]
  %s2 = inlined_call_operand.vmem [shape: f32[1,32], index: 2, kind: input, shape index: {}]
  %s3 = inlined_call_operand.vmem [shape: bf16[32,4], index: 3, kind: input, shape index: {}]
  %s4 = inlined_call_operand.vmem [shape: f32[1,4], index: 4, kind: input, shape index: {}]
  %s5 = inlined_call_operand.hbm [shape: f32[2,4], index: 5, kind: output, shape index: {}]
  %s6 = sld [smem:[#allocation0]]
  $region30: #{dqn_forward.5} parent=0
    _
  %s8 = ssub.s32 1, %s6
  %s9 = scalar_select 0, %s8, %s6
  $region1: #{dqn_forward.5} parent=0
    #allocation2 [shape = 'u8[8192]{0}', space=vmem, size = 0x2000, scoped, tag = 'output window, operand 0, single buffered']
    #allocation3 [shape = 's32[1]{0}', space=sflag, size = 0x4, scoped, tag = 'scoped memory for dqn_forward.5']
    %10 = vsyncpa [#allocation3], 0
    // Predicated region
    $region2: #{dqn_forward.5} parent=1 // pred_check
      _
    $region3: #{dqn_forward.5} parent=1 // pred_check_branch
      %12 = sbr.rel (0) target = $region5
    $region4: #{dqn_forward.5} parent=1 // pred_region
      _
    $region5: #{dqn_forward.5} parent=1 // pred_fallthru
      _
    // Predicated region
    $region6: #{dqn_forward.5} parent=1 // pred_check
      _
    $region7: #{dqn_forward.5} parent=1 // pred_check_branch
      %14 = sbr.rel (0) target = $region9
    $region8: #{dqn_forward.5} parent=1 // pred_region
      _
    $region9: #{dqn_forward.5} parent=1 // pred_fallthru
      _
    // Predicated region
    $region10: #{dqn_forward.5} parent=1 // pred_check
      _
    $region11: #{dqn_forward.5} parent=1 // pred_check_branch
      %16 = sbr.rel (0) target = $region13
    $region12: #{dqn_forward.5} parent=1 // pred_region
      _
    $region13: #{dqn_forward.5} parent=1 // pred_fallthru
      _
    // Predicated region
    $region14: #{dqn_forward.5} parent=1 // pred_check
      _
    $region15: #{dqn_forward.5} parent=1 // pred_check_branch
      %18 = sbr.rel (0) target = $region17
    $region16: #{dqn_forward.5} parent=1 // pred_region
      _
    $region17: #{dqn_forward.5} parent=1 // pred_fallthru
      _
    // Predicated region
    $region18: #{dqn_forward.5} parent=1 // pred_check
      _
    $region19: #{dqn_forward.5} parent=1 // pred_check_branch
      %20 = sbr.rel (0) target = $region21
    $region20: #{dqn_forward.5} parent=1 // pred_region
      _
    $region21: #{dqn_forward.5} parent=1 // pred_fallthru
      _
    %v22 = vld [vmem:[%s0] sm:$0x7f]
    %v23 = vld [vmem:[%s0 + $0x7] sm:$0x7f]
    %v24 = vld [vmem:[%s0 + $0xe] sm:$0x7f]
    %v25 = vld [vmem:[%s0 + $0x15] sm:$0x7f]
    %v26 = vld [vmem:[%s0 + $0x1c] sm:$0x7f]
    %v27 = vld [vmem:[%s0 + $0x23] sm:$0x7f]
    %v28 = vld [vmem:[%s0 + $0x2a] sm:$0x7f]
    %v29 = vld [vmem:[%s0 + $0x31] sm:$0x7f]
    %v30 = vld [vmem:[%s1] sm:$0xf]
    %v31 = vld [vmem:[%s1 + $0x4] sm:$0xf]
    %v32 = vld [vmem:[%s1 + $0x8] sm:$0xf]
    %v33 = vld [vmem:[%s1 + $0xc] sm:$0xf]
    %v34 = vld [vmem:[%s1 + $0x10] sm:$0xf]
    %v35 = vld [vmem:[%s1 + $0x14] sm:$0xf]
    %v36 = vld [vmem:[%s1 + $0x18] sm:$0xf]
    %v37 = vld [vmem:[%s1 + $0x1c] sm:$0xf]
    %v38 = vld [vmem:[%s1 + $0x20] sm:$0xf]
    %v39 = vld [vmem:[%s1 + $0x24] sm:$0xf]
    %v40 = vld [vmem:[%s1 + $0x28] sm:$0xf]
    %v41 = vld [vmem:[%s1 + $0x2c] sm:$0xf]
    %v42 = vld [vmem:[%s1 + $0x30] sm:$0xf]
    %v43 = vld [vmem:[%s1 + $0x34] sm:$0xf]
    %v44 = vld [vmem:[%s1 + $0x38] sm:$0xf]
    %v45 = vld [vmem:[%s1 + $0x3c] sm:$0xf]
    %v46 = vld [vmem:[%s1 + $0x40] sm:$0xf]
    %v47 = vld [vmem:[%s1 + $0x44] sm:$0xf]
    %v48 = vld [vmem:[%s1 + $0x48] sm:$0xf]
    %v49 = vld [vmem:[%s1 + $0x4c] sm:$0xf]
    %v50 = vld [vmem:[%s1 + $0x50] sm:$0xf]
    %v51 = vld [vmem:[%s1 + $0x54] sm:$0xf]
    %v52 = vld [vmem:[%s1 + $0x58] sm:$0xf]
    %v53 = vld [vmem:[%s1 + $0x5c] sm:$0xf]
    %v54 = vld [vmem:[%s1 + $0x60] sm:$0xf]
    %v55 = vld [vmem:[%s1 + $0x64] sm:$0xf]
    %v56 = vld [vmem:[%s1 + $0x68] sm:$0xf]
    %v57 = vld [vmem:[%s1 + $0x6c] sm:$0xf]
    %v58 = vld [vmem:[%s1 + $0x70] sm:$0xf]
    %v59 = vld [vmem:[%s1 + $0x74] sm:$0xf]
    %v60 = vld [vmem:[%s1 + $0x78] sm:$0xf]
    %v61 = vld [vmem:[%s1 + $0x7c] sm:$0xf]
    %v62 = vld [vmem:[%s1 + $0x80] sm:$0xf]
    %v63 = vld [vmem:[%s1 + $0x84] sm:$0xf]
    %v64 = vld [vmem:[%s1 + $0x88] sm:$0xf]
    %v65 = vld [vmem:[%s1 + $0x8c] sm:$0xf]
    %v66 = vld [vmem:[%s1 + $0x90] sm:$0xf]
    %v67 = vld [vmem:[%s1 + $0x94] sm:$0xf]
    %v68 = vld [vmem:[%s1 + $0x98] sm:$0xf]
    %v69 = vld [vmem:[%s1 + $0x9c] sm:$0xf]
    %v70 = vld [vmem:[%s1 + $0xa0] sm:$0xf]
    %v71 = vld [vmem:[%s1 + $0xa4] sm:$0xf]
    %v72 = vld [vmem:[%s1 + $0xa8] sm:$0xf]
    %v73 = vld [vmem:[%s1 + $0xac] sm:$0xf]
    %v74 = vld [vmem:[%s1 + $0xb0] sm:$0xf]
    %v75 = vld [vmem:[%s1 + $0xb4] sm:$0xf]
    %v76 = vld [vmem:[%s1 + $0xb8] sm:$0xf]
    %v77 = vld [vmem:[%s1 + $0xbc] sm:$0xf]
    %v78 = vld [vmem:[%s1 + $0xc0] sm:$0xf]
    %v79 = vld [vmem:[%s1 + $0xc4] sm:$0xf]
    %v80 = vld [vmem:[%s1 + $0xc8] sm:$0xf]
    %v81 = vld [vmem:[%s1 + $0xcc] sm:$0xf]
    %v82 = vld [vmem:[%s1 + $0xd0] sm:$0xf]
    %v83 = vld [vmem:[%s1 + $0xd4] sm:$0xf]
    %v84 = vld [vmem:[%s1 + $0xd8] sm:$0xf]
    %v85 = vld [vmem:[%s1 + $0xdc] sm:$0xf]
    %v86 = vld [vmem:[%s1 + $0xe0] sm:$0xf]
    %v87 = vld [vmem:[%s1 + $0xe4] sm:$0xf]
    %v88 = vld [vmem:[%s1 + $0xe8] sm:$0xf]
    %v89 = vld [vmem:[%s1 + $0xec] sm:$0xf]
    %v90 = vld [vmem:[%s1 + $0xf0] sm:$0xf]
    %v91 = vld [vmem:[%s1 + $0xf4] sm:$0xf]
    %v92 = vld [vmem:[%s1 + $0xf8] sm:$0xf]
    %v93 = vld [vmem:[%s1 + $0xfc] sm:$0xf]
    %v94 = vld [vmem:[%s1 + $0x100] sm:$0xf]
    %v95 = vld [vmem:[%s1 + $0x104] sm:$0xf]
    %v96 = vld [vmem:[%s1 + $0x108] sm:$0xf]
    %v97 = vld [vmem:[%s1 + $0x10c] sm:$0xf]
    %v98 = vld [vmem:[%s1 + $0x110] sm:$0xf]
    %v99 = vld [vmem:[%s1 + $0x114] sm:$0xf]
    %v100 = vld [vmem:[%s1 + $0x118] sm:$0xf]
    %v101 = vld [vmem:[%s1 + $0x11c] sm:$0xf]
    %v102 = vld [vmem:[%s1 + $0x120] sm:$0xf]
    %v103 = vld [vmem:[%s1 + $0x124] sm:$0xf]
    %v104 = vld [vmem:[%s1 + $0x128] sm:$0xf]
    %v105 = vld [vmem:[%s1 + $0x12c] sm:$0xf]
    %v106 = vld [vmem:[%s1 + $0x130] sm:$0xf]
    %v107 = vld [vmem:[%s1 + $0x134] sm:$0xf]
    %v108 = vld [vmem:[%s1 + $0x138] sm:$0xf]
    %v109 = vld [vmem:[%s1 + $0x13c] sm:$0xf]
    %v110 = vld [vmem:[%s1 + $0x140] sm:$0xf]
    %v111 = vld [vmem:[%s1 + $0x144] sm:$0xf]
    %v112 = vld [vmem:[%s1 + $0x148] sm:$0xf]
    %v113 = vld [vmem:[%s1 + $0x14c] sm:$0xf]
    %v114 = vld [vmem:[%s1 + $0x150] sm:$0xf]
    %v115 = vld [vmem:[%s1 + $0x154] sm:$0xf]
    %v116 = vld [vmem:[%s1 + $0x158] sm:$0xf]
    %v117 = vld [vmem:[%s1 + $0x15c] sm:$0xf]
    %v118 = vld [vmem:[%s1 + $0x160] sm:$0xf]
    %v119 = vld [vmem:[%s1 + $0x164] sm:$0xf]
    %v120 = vld [vmem:[%s1 + $0x168] sm:$0xf]
    %v121 = vld [vmem:[%s1 + $0x16c] sm:$0xf]
    %v122 = vld [vmem:[%s1 + $0x170] sm:$0xf]
    %v123 = vld [vmem:[%s1 + $0x174] sm:$0xf]
    %v124 = vld [vmem:[%s1 + $0x178] sm:$0xf]
    %v125 = vld [vmem:[%s1 + $0x17c] sm:$0xf]
    %v126 = vld [vmem:[%s1 + $0x180] sm:$0xf]
    %v127 = vld [vmem:[%s1 + $0x184] sm:$0xf]
    %v128 = vld [vmem:[%s1 + $0x188] sm:$0xf]
    %v129 = vld [vmem:[%s1 + $0x18c] sm:$0xf]
    %v130 = vld [vmem:[%s2] sm:$0x1]
    %v132 = vperm.slane %v130, 0
    %135 = vst [vmem:[#allocation1] ss:$9 sm:$0xff] %v22
    %s137 = scalar_lea.vmem [#allocation1], 1
    %138 = vst [vmem:[%s137] ss:$9 sm:$0xff] %v23
    %s140 = scalar_lea.vmem [#allocation1], 2
    %141 = vst [vmem:[%s140] ss:$9 sm:$0xff] %v24
    %s143 = scalar_lea.vmem [#allocation1], 3
    %144 = vst [vmem:[%s143] ss:$9 sm:$0xff] %v25
    %s146 = scalar_lea.vmem [#allocation1], 4
    %147 = vst [vmem:[%s146] ss:$9 sm:$0xff] %v26
    %s149 = scalar_lea.vmem [#allocation1], 5
    %150 = vst [vmem:[%s149] ss:$9 sm:$0xff] %v27
    %s152 = scalar_lea.vmem [#allocation1], 6
    %153 = vst [vmem:[%s152] ss:$9 sm:$0xff] %v28
    %s155 = scalar_lea.vmem [#allocation1], 7
    %156 = vst [vmem:[%s155] ss:$9 sm:$0xff] %v29
    %v157 = vld [vmem:[#allocation1] sm:$0xff]
    %v158 = vld [vmem:[#allocation1 + $0x9] sm:$0xff]
    %v159 = vld [vmem:[#allocation1 + $0x12] sm:$0xff]
    %v160 = vld [vmem:[#allocation1 + $0x1b] sm:$0xff]
    %v161 = vld [vmem:[#allocation1 + $0x24] sm:$0xff]
    %v162 = vld [vmem:[#allocation1 + $0x2d] sm:$0xff]
    %v163 = vld [vmem:[#allocation1 + $0x36] sm:$0xff]
    %v270 = vunpack.c.l.b16 %v30
    %v271 = vunpack.c.l.b16 %v31
    %v272 = vunpack.c.l.b16 %v32
    %v273 = vunpack.c.l.b16 %v33
    %v274 = vunpack.c.l.b16 %v34
    %v275 = vunpack.c.l.b16 %v35
    %v276 = vunpack.c.l.b16 %v36
    %v277 = vunpack.c.l.b16 %v37
    %v278 = vunpack.c.l.b16 %v38
    %v279 = vunpack.c.l.b16 %v39
    %v280 = vunpack.c.l.b16 %v40
    %v281 = vunpack.c.l.b16 %v41
    %v282 = vunpack.c.l.b16 %v42
    %v283 = vunpack.c.l.b16 %v43
    %v284 = vunpack.c.l.b16 %v44
    %v285 = vunpack.c.l.b16 %v45
    %v286 = vunpack.c.l.b16 %v46
    %v287 = vunpack.c.l.b16 %v47
    %v288 = vunpack.c.l.b16 %v48
    %v289 = vunpack.c.l.b16 %v49
    %v290 = vunpack.c.l.b16 %v50
    %v291 = vunpack.c.l.b16 %v51
    %v292 = vunpack.c.l.b16 %v52
    %v293 = vunpack.c.l.b16 %v53
    %v294 = vunpack.c.l.b16 %v54
    %v295 = vunpack.c.l.b16 %v55
    %v296 = vunpack.c.l.b16 %v56
    %v297 = vunpack.c.l.b16 %v57
    %v298 = vunpack.c.l.b16 %v58
    %v299 = vunpack.c.l.b16 %v59
    %v300 = vunpack.c.l.b16 %v60
    %v301 = vunpack.c.l.b16 %v61
    %v302 = vunpack.c.l.b16 %v62
    %v303 = vunpack.c.l.b16 %v63
    %v304 = vunpack.c.l.b16 %v64
    %v305 = vunpack.c.l.b16 %v65
    %v306 = vunpack.c.l.b16 %v66
    %v307 = vunpack.c.l.b16 %v67
    %v308 = vunpack.c.l.b16 %v68
    %v309 = vunpack.c.l.b16 %v69
    %v310 = vunpack.c.l.b16 %v70
    %v311 = vunpack.c.l.b16 %v71
    %v312 = vunpack.c.l.b16 %v72
    %v313 = vunpack.c.l.b16 %v73
    %v314 = vunpack.c.l.b16 %v74
    %v315 = vunpack.c.l.b16 %v75
    %v316 = vunpack.c.l.b16 %v76
    %v317 = vunpack.c.l.b16 %v77
    %v318 = vunpack.c.l.b16 %v78
    %v319 = vunpack.c.l.b16 %v79
    %v320 = vunpack.c.l.b16 %v80
    %v321 = vunpack.c.l.b16 %v81
    %v322 = vunpack.c.l.b16 %v82
    %v323 = vunpack.c.l.b16 %v83
    %v324 = vunpack.c.l.b16 %v84
    %v325 = vunpack.c.l.b16 %v85
    %v326 = vunpack.c.l.b16 %v86
    %v327 = vunpack.c.l.b16 %v87
    %v328 = vunpack.c.l.b16 %v88
    %v329 = vunpack.c.l.b16 %v89
    %v330 = vunpack.c.l.b16 %v90
    %v331 = vunpack.c.l.b16 %v91
    %v332 = vunpack.c.l.b16 %v92
    %v333 = vunpack.c.l.b16 %v93
    %v334 = vunpack.c.l.b16 %v94
    %v335 = vunpack.c.l.b16 %v95
    %v336 = vunpack.c.l.b16 %v96
    %v337 = vunpack.c.l.b16 %v97
    %v338 = vunpack.c.l.b16 %v98
    %v339 = vunpack.c.l.b16 %v99
    %v340 = vunpack.c.l.b16 %v100
    %v341 = vunpack.c.l.b16 %v101
    %v342 = vunpack.c.l.b16 %v102
    %v343 = vunpack.c.l.b16 %v103
    %v344 = vunpack.c.l.b16 %v104
    %v345 = vunpack.c.l.b16 %v105
    %v346 = vunpack.c.l.b16 %v106
    %v347 = vunpack.c.l.b16 %v107
    %v348 = vunpack.c.l.b16 %v108
    %v349 = vunpack.c.l.b16 %v109
    %v350 = vunpack.c.l.b16 %v110
    %v351 = vunpack.c.l.b16 %v111
    %v352 = vunpack.c.l.b16 %v112
    %v353 = vunpack.c.l.b16 %v113
    %v354 = vunpack.c.l.b16 %v114
    %v355 = vunpack.c.l.b16 %v115
    %v356 = vunpack.c.l.b16 %v116
    %v357 = vunpack.c.l.b16 %v117
    %v358 = vunpack.c.l.b16 %v118
    %v359 = vunpack.c.l.b16 %v119
    %v360 = vunpack.c.l.b16 %v120
    %v361 = vunpack.c.l.b16 %v121
    %v362 = vunpack.c.l.b16 %v122
    %v363 = vunpack.c.l.b16 %v123
    %v364 = vunpack.c.l.b16 %v124
    %v365 = vunpack.c.l.b16 %v125
    %v366 = vunpack.c.l.b16 %v126
    %v367 = vunpack.c.l.b16 %v127
    %v368 = vunpack.c.l.b16 %v128
    %v369 = vunpack.c.l.b16 %v129
    %v370 = vpack.c.b16 %v271, %v270
    %v371 = vpack.c.b16 %v273, %v272
    %v372 = vpack.c.b16 %v275, %v274
    %v373 = vpack.c.b16 %v277, %v276
    %v374 = vpack.c.b16 %v279, %v278
    %v375 = vpack.c.b16 %v281, %v280
    %v376 = vpack.c.b16 %v283, %v282
    %v377 = vpack.c.b16 %v285, %v284
    %v378 = vpack.c.b16 %v287, %v286
    %v379 = vpack.c.b16 %v289, %v288
    %v380 = vpack.c.b16 %v291, %v290
    %v381 = vpack.c.b16 %v293, %v292
    %v382 = vpack.c.b16 %v295, %v294
    %v383 = vpack.c.b16 %v297, %v296
    %v384 = vpack.c.b16 %v299, %v298
    %v385 = vpack.c.b16 %v301, %v300
    %v386 = vpack.c.b16 %v303, %v302
    %v387 = vpack.c.b16 %v305, %v304
    %v388 = vpack.c.b16 %v307, %v306
    %v389 = vpack.c.b16 %v309, %v308
    %v390 = vpack.c.b16 %v311, %v310
    %v391 = vpack.c.b16 %v313, %v312
    %v392 = vpack.c.b16 %v315, %v314
    %v393 = vpack.c.b16 %v317, %v316
    %v394 = vpack.c.b16 %v319, %v318
    %v395 = vpack.c.b16 %v321, %v320
    %v396 = vpack.c.b16 %v323, %v322
    %v397 = vpack.c.b16 %v325, %v324
    %v398 = vpack.c.b16 %v327, %v326
    %v399 = vpack.c.b16 %v329, %v328
    %v400 = vpack.c.b16 %v331, %v330
    %v401 = vpack.c.b16 %v333, %v332
    %v402 = vpack.c.b16 %v335, %v334
    %v403 = vpack.c.b16 %v337, %v336
    %v404 = vpack.c.b16 %v339, %v338
    %v405 = vpack.c.b16 %v341, %v340
    %v406 = vpack.c.b16 %v343, %v342
    %v407 = vpack.c.b16 %v345, %v344
    %v408 = vpack.c.b16 %v347, %v346
    %v409 = vpack.c.b16 %v349, %v348
    %v410 = vpack.c.b16 %v351, %v350
    %v411 = vpack.c.b16 %v353, %v352
    %v412 = vpack.c.b16 %v355, %v354
    %v413 = vpack.c.b16 %v357, %v356
    %v414 = vpack.c.b16 %v359, %v358
    %v415 = vpack.c.b16 %v361, %v360
    %v416 = vpack.c.b16 %v363, %v362
    %v417 = vpack.c.b16 %v365, %v364
    %v418 = vpack.c.b16 %v367, %v366
    %v419 = vpack.c.b16 %v369, %v368
    %vm470 = vcmask 261120
    %v471 = vsel %vm470, %v163, 0
    %473 = vmatpush.bf16.msra.mxu0 %v377
    %474 = vmatpush.bf16.msra.mxu0 %v376
    %475 = vmatpush.bf16.msra.mxu0 %v375
    %476 = vmatpush.bf16.msra.mxu0 %v374
    %477 = vmatpush.bf16.msra.mxu0 %v373
    %478 = vmatpush.bf16.msra.mxu0 %v372
    %479 = vmatpush.bf16.msra.mxu0 %v371
    %480 = vmatpush.bf16.msra.mxu0 %v370
    %481 = vmatmul.bf16.gmra.mxu0 %v157
    %v482 = vpop.f32.mrf.mxu0
    %v483 = vadd.f32 %v132, %v482
    %v484 = vpop.f32.mrf.mxu0
    %v485 = vadd.f32 %v132, %v484
    %486 = vdwg.mxu0
    %487 = vmatpush.bf16.msra.mxu0 %v385
    %488 = vmatpush.bf16.msra.mxu0 %v384
    %489 = vmatpush.bf16.msra.mxu0 %v383
    %490 = vmatpush.bf16.msra.mxu0 %v382
    %491 = vmatpush.bf16.msra.mxu0 %v381
    %492 = vmatpush.bf16.msra.mxu0 %v380
    %493 = vmatpush.bf16.msra.mxu0 %v379
    %494 = vmatpush.bf16.msra.mxu0 %v378
    %495 = vmatmul.bf16.gmra.mxu0 %v158
    %v496 = vpop.f32.mrf.mxu0
    %v497 = vadd.f32 %v483, %v496
    %v498 = vpop.f32.mrf.mxu0
    %v499 = vadd.f32 %v485, %v498
    %500 = vdwg.mxu0
    %501 = vmatpush.bf16.msra.mxu0 %v393
    %502 = vmatpush.bf16.msra.mxu0 %v392
    %503 = vmatpush.bf16.msra.mxu0 %v391
    %504 = vmatpush.bf16.msra.mxu0 %v390
    %505 = vmatpush.bf16.msra.mxu0 %v389
    %506 = vmatpush.bf16.msra.mxu0 %v388
    %507 = vmatpush.bf16.msra.mxu0 %v387
    %508 = vmatpush.bf16.msra.mxu0 %v386
    %509 = vmatmul.bf16.gmra.mxu0 %v159
    %v510 = vpop.f32.mrf.mxu0
    %v511 = vadd.f32 %v497, %v510
    %v512 = vpop.f32.mrf.mxu0
    %v513 = vadd.f32 %v499, %v512
    %514 = vdwg.mxu0
    %515 = vmatpush.bf16.msra.mxu0 %v401
    %516 = vmatpush.bf16.msra.mxu0 %v400
    %517 = vmatpush.bf16.msra.mxu0 %v399
    %518 = vmatpush.bf16.msra.mxu0 %v398
    %519 = vmatpush.bf16.msra.mxu0 %v397
    %520 = vmatpush.bf16.msra.mxu0 %v396
    %521 = vmatpush.bf16.msra.mxu0 %v395
    %522 = vmatpush.bf16.msra.mxu0 %v394
    %523 = vmatmul.bf16.gmra.mxu0 %v160
    %v524 = vpop.f32.mrf.mxu0
    %v525 = vadd.f32 %v511, %v524
    %v526 = vpop.f32.mrf.mxu0
    %v527 = vadd.f32 %v513, %v526
    %528 = vdwg.mxu0
    %529 = vmatpush.bf16.msra.mxu0 %v409
    %530 = vmatpush.bf16.msra.mxu0 %v408
    %531 = vmatpush.bf16.msra.mxu0 %v407
    %532 = vmatpush.bf16.msra.mxu0 %v406
    %533 = vmatpush.bf16.msra.mxu0 %v405
    %534 = vmatpush.bf16.msra.mxu0 %v404
    %535 = vmatpush.bf16.msra.mxu0 %v403
    %536 = vmatpush.bf16.msra.mxu0 %v402
    %537 = vmatmul.bf16.gmra.mxu0 %v161
    %v538 = vpop.f32.mrf.mxu0
    %v539 = vadd.f32 %v525, %v538
    %v540 = vpop.f32.mrf.mxu0
    %v541 = vadd.f32 %v527, %v540
    %542 = vdwg.mxu0
    %543 = vmatpush.bf16.msra.mxu0 %v417
    %544 = vmatpush.bf16.msra.mxu0 %v416
    %545 = vmatpush.bf16.msra.mxu0 %v415
    %546 = vmatpush.bf16.msra.mxu0 %v414
    %547 = vmatpush.bf16.msra.mxu0 %v413
    %548 = vmatpush.bf16.msra.mxu0 %v412
    %549 = vmatpush.bf16.msra.mxu0 %v411
    %550 = vmatpush.bf16.msra.mxu0 %v410
    %551 = vmatmul.bf16.gmra.mxu0 %v162
    %v552 = vpop.f32.mrf.mxu0
    %v553 = vadd.f32 %v539, %v552
    %v554 = vpop.f32.mrf.mxu0
    %v555 = vadd.f32 %v541, %v554
    %556 = vdwg.mxu0
    %557 = vmatpush.bf16.msra.mxu0 0
    %558 = vmatpush.bf16.msra.mxu0 0
    %559 = vmatpush.bf16.msra.mxu0 0
    %560 = vmatpush.bf16.msra.mxu0 0
    %561 = vmatpush.bf16.msra.mxu0 0
    %562 = vmatpush.bf16.msra.mxu0 0
    %563 = vmatpush.bf16.msra.mxu0 %v419
    %564 = vmatpush.bf16.msra.mxu0 %v418
    %565 = vmatmul.bf16.gmra.mxu0 %v471
    %v566 = vpop.f32.mrf.mxu0
    %v567 = vadd.f32 %v553, %v566
    %v568 = vpop.f32.mrf.mxu0
    %v569 = vadd.f32 %v555, %v568
    %570 = vdwg.mxu0
    %v571 = vmax.f32 %v567, 0.0
    %v572 = vmax.f32 %v569, 0.0
    %v573 = vpack.c.bf16 %v572, %v571
    %v574 = vld [vmem:[%s3] sm:$0xf]
    %v575 = vld [vmem:[%s3 + $0x4] sm:$0xf]
    %v576 = vld [vmem:[%s3 + $0x8] sm:$0xf]
    %v577 = vld [vmem:[%s3 + $0xc] sm:$0xf]
    %v578 = vld [vmem:[%s4] sm:$0x1]
    %v580 = vperm.slane %v578, 0
    %v586 = vunpack.c.l.b16 %v574
    %v587 = vunpack.c.l.b16 %v575
    %v588 = vunpack.c.l.b16 %v576
    %v589 = vunpack.c.l.b16 %v577
    %v590 = vpack.c.b16 %v587, %v586
    %v591 = vpack.c.b16 %v589, %v588
    %v595 = vsel %vm470, %v573, 0
    %597 = vmatpush.bf16.msra.mxu0 0
    %598 = vmatpush.bf16.msra.mxu0 0
    %599 = vmatpush.bf16.msra.mxu0 0
    %600 = vmatpush.bf16.msra.mxu0 0
    %601 = vmatpush.bf16.msra.mxu0 0
    %602 = vmatpush.bf16.msra.mxu0 0
    %603 = vmatpush.bf16.msra.mxu0 %v591
    %604 = vmatpush.bf16.msra.mxu0 %v590
    %605 = vmatmul.bf16.gmra.mxu0 %v595
    %v606 = vpop.f32.mrf.mxu0
    %v607 = vadd.f32 %v580, %v606
    %v608 = vpop.f32.mrf.mxu0
    %v609 = vadd.f32 %v580, %v608
    %610 = vdwg.mxu0
    %vm611 = vcmask 31744
    %612 = vst.msk [vmem:[#allocation2] sm:$0xff] %vm611, %v607
    %613 = vst.msk [vmem:[#allocation2 + $0x8] sm:$0xff] %vm611, %v609
    // Predicated region
    $region22: #{dqn_forward.5} parent=1 // pred_check
      _
    $region23: #{dqn_forward.5} parent=1 // pred_check_branch
      %615 = sbr.rel (0) target = $region25
    $region24: #{dqn_forward.5} parent=1 // pred_region
      %617 = vsyncadd [#allocation3], 224
      %s618 = sshll.u32 [#allocation2], 4
      %s619 = int_to_ptr.vmem [resolvable:$true] %s618
      %s620 = sshll.u32 %s5, 4
      %s621 = int_to_ptr.hbm [resolvable:$true] %s620
      %626 = dma.vmem_to_hbm [thread:$0]  %s619, 32, %s621, [#allocation3], 32, 32, 2
    $region25: #{dqn_forward.5} parent=1 // pred_fallthru
      _
    // Predicated region
    $region26: #{dqn_forward.5} parent=1 // pred_check
      _
    $region27: #{dqn_forward.5} parent=1 // pred_check_branch
      %628 = sbr.rel (0) target = $region29
    $region28: #{dqn_forward.5} parent=1 // pred_region
      %630 = dma.done [#allocation3], 256
    $region29: #{dqn_forward.5} parent=1 // pred_fallthru
      _
    %631 = vsyncpa [#allocation3], 1

</llo_original>
